<compile_context>
chip_gen: v7x
topology: tpu7x:2x2x1
jax: 0.10.0
libtpu: 0.0.40
codegen_flags: <defaults>
</compile_context>

<pallas_src>
import math
from functools import partial

import jax
import jax.numpy as jnp
from jax import lax
from jax.experimental import pallas as pl
from jax.experimental.pallas import tpu as pltpu


def cross_attn_kernel(x_ref, ctx_ref, wq_ref, wk_ref, wv_ref, wo_ref, bo_ref,
                      o_ref, q_sc, m_sc, l_sc, acc_sc,
                      *, heads, dim_head, scale):
    """One (batch, q-tile, kv-tile) grid step.

    x_ref   : (1, tn, dq)       q-tile of the query input
    ctx_ref : (1, tm, dc)       kv-tile of the context
    wq_ref  : (heads, dq, d)    per-head Q weights        (resident)
    wk_ref  : (heads, dc, d)    per-head K weights        (resident)
    wv_ref  : (heads, dc, d)    per-head V weights        (resident)
    wo_ref  : (heads, d, dq)    per-head out-proj weights (resident)
    bo_ref  : (1, dq)           out-proj bias             (resident)
    o_ref   : (1, tn, dq)       output q-tile (written at the last kv step)
    q_sc    : (heads, tn, d)    cached, pre-scaled Q projection (per q tile)
    m_sc    : (heads, tn, 1)    running max   (online softmax)
    l_sc    : (heads, tn, 1)    running sum   (online softmax)
    acc_sc  : (heads, tn, d)    running P@V accumulator
    """
    kv = pl.program_id(2)
    last_kv = pl.num_programs(2) - 1

    @pl.when(kv == 0)
    def _init():
        x = x_ref[0]                                                       # (tn, dq)
        for h in range(heads):
            # Q projection with the softmax scale folded in once per q tile.
            q_sc[h] = scale * jnp.dot(x, wq_ref[h],
                                      preferred_element_type=jnp.float32)
        m_sc[...] = jnp.full_like(m_sc, -jnp.inf)
        l_sc[...] = jnp.zeros_like(l_sc)
        acc_sc[...] = jnp.zeros_like(acc_sc)

    ctx = ctx_ref[0]                                                       # (tm, dc)
    for h in range(heads):
        kh = jnp.dot(ctx, wk_ref[h], preferred_element_type=jnp.float32)   # (tm, d)
        vh = jnp.dot(ctx, wv_ref[h], preferred_element_type=jnp.float32)   # (tm, d)
        qh = q_sc[h]                                                       # (tn, d)
        # QK^T without materializing kh.T: contract the last dims directly.
        sim = lax.dot_general(qh, kh, (((1,), (1,)), ((), ())),
                              preferred_element_type=jnp.float32)          # (tn, tm)
        m_prev = m_sc[h]
        m_new = jnp.maximum(m_prev, sim.max(axis=-1, keepdims=True))
        alpha = jnp.exp(m_prev - m_new)
        p = jnp.exp(sim - m_new)
        l_sc[h] = alpha * l_sc[h] + p.sum(axis=-1, keepdims=True)
        acc_sc[h] = alpha * acc_sc[h] + jnp.dot(p.astype(vh.dtype), vh,
                                                preferred_element_type=jnp.float32)
        m_sc[h] = m_new

    @pl.when(kv == last_kv)
    def _finalize():
        tn, dq = o_ref.shape[1], o_ref.shape[2]
        y = jnp.zeros((tn, dq), jnp.float32)
        for h in range(heads):
            # softmax normalization via the EUP approx reciprocal (free slot)
            out_h = acc_sc[h] * pl.reciprocal(l_sc[h], approx=True)        # (tn, d)
            # fold each head directly into the output projection (no concat)
            y = y + jnp.dot(out_h, wo_ref[h], preferred_element_type=jnp.float32)
        y = y + bo_ref[...]
        o_ref[0] = y.astype(o_ref.dtype)


def _pick_tile(dim, target):
    """Largest multiple-of-8 divisor of `dim` that is <= target (else the full dim)."""
    if dim <= target:
        return dim
    for t in range(target, 7, -1):
        if dim % t == 0 and t % 8 == 0:
            return t
    return dim


def cross_attention(x, context, wq, wk, wv, wo, bo, *, heads, dim_head,
                    tile_n=256, tile_m=512):
    b, n, dq = x.shape
    _, m, dc = context.shape
    inner = heads * dim_head
    assert wq.shape == (dq, inner) and wk.shape == (dc, inner)
    assert wv.shape == (dc, inner) and wo.shape == (inner, dq)
    scale = dim_head ** (-0.5)

    # Host-side (free): split weights per head so the kernel never lane-slices.
    wq_h = wq.reshape(dq, heads, dim_head).transpose(1, 0, 2)   # (h, dq, d)
    wk_h = wk.reshape(dc, heads, dim_head).transpose(1, 0, 2)   # (h, dc, d)
    wv_h = wv.reshape(dc, heads, dim_head).transpose(1, 0, 2)   # (h, dc, d)
    wo_h = wo.reshape(heads, dim_head, dq)                      # (h, d, dq)
    bo2d = bo.reshape(1, dq)

    tn = _pick_tile(n, tile_n)
    tm = _pick_tile(m, tile_m)
    grid = (b, n // tn, m // tm)

    kernel = partial(cross_attn_kernel, heads=heads, dim_head=dim_head, scale=scale)
    return pl.pallas_call(
        kernel,
        out_shape=jax.ShapeDtypeStruct((b, n, dq), x.dtype),
        grid=grid,
        in_specs=[
            # x: batch i, q-tile j, full feature dim
            pl.BlockSpec((1, tn, dq),              lambda i, j, k: (i, j, 0)),
            # context: batch i, kv-tile k along the sequence axis, full feature dim
            pl.BlockSpec((1, tm, dc),              lambda i, j, k: (i, k, 0)),
            # weights / bias: resident (constant index maps => no re-DMA per step)
            pl.BlockSpec((heads, dq, dim_head),    lambda i, j, k: (0, 0, 0)),
            pl.BlockSpec((heads, dc, dim_head),    lambda i, j, k: (0, 0, 0)),
            pl.BlockSpec((heads, dc, dim_head),    lambda i, j, k: (0, 0, 0)),
            pl.BlockSpec((heads, dim_head, dq),    lambda i, j, k: (0, 0, 0)),
            pl.BlockSpec((1, dq),                  lambda i, j, k: (0, 0)),
        ],
        out_specs=pl.BlockSpec((1, tn, dq), lambda i, j, k: (i, j, 0)),
        scratch_shapes=[
            pltpu.VMEM((heads, tn, dim_head), jnp.float32),   # cached scaled Q
            pltpu.VMEM((heads, tn, 1), jnp.float32),          # running max
            pltpu.VMEM((heads, tn, 1), jnp.float32),          # running sum
            pltpu.VMEM((heads, tn, dim_head), jnp.float32),   # P@V accumulator
        ],
        compiler_params=pltpu.CompilerParams(
            dimension_semantics=("parallel", "parallel", "arbitrary"),
            vmem_limit_bytes=48 * 1024 * 1024,
        ),
    )(x, context, wq_h, wk_h, wv_h, wo_h, bo2d)


def cross_attention_ref(x, context, wq, wk, wv, wo, bo, *, heads, dim_head):
    # Pure-JAX reference mirroring the PyTorch forward.
    b, n, dq = x.shape
    scale = dim_head ** (-0.5)
    q = x @ wq
    k = context @ wk
    v = context @ wv

    def split(t):
        bb, nn, _ = t.shape
        return t.reshape(bb, nn, heads, dim_head).transpose(0, 2, 1, 3)

    qh, kh, vh = split(q), split(k), split(v)                 # (b, h, n, d)
    sim = jnp.einsum('bhid,bhjd->bhij', qh, kh) * scale
    attn = jax.nn.softmax(sim, axis=-1)
    out = jnp.einsum('bhij,bhjd->bhid', attn, vh)             # (b, h, n, d)
    out = out.transpose(0, 2, 1, 3).reshape(b, n, heads * dim_head)
    return out @ wo + bo


if __name__ == "__main__":
    # Small shapes consistent with the module: self-attention (context = x).
    batch, seq, query_dim = 2, 16, 32
    heads, dim_head = 2, 16
    inner_dim = heads * dim_head
    context_dim = query_dim  # context defaults to x

    key = jax.random.PRNGKey(0)
    kx, kq, kk, kv, ko, kb = jax.random.split(key, 6)

    x = jax.random.normal(kx, (batch, seq, query_dim), dtype=jnp.float32)
    context = x  # default(context, x)

    # Deterministic parameter init (uniform +/- 1/sqrt(fan_in), like nn.Linear).
    def init_w(k, d_in, d_out):
        bound = 1.0 / math.sqrt(d_in)
        return jax.random.uniform(k, (d_in, d_out), jnp.float32, -bound, bound)

    wq = init_w(kq, query_dim,   inner_dim)
    wk = init_w(kk, context_dim, inner_dim)
    wv = init_w(kv, context_dim, inner_dim)
    wo = init_w(ko, inner_dim,   query_dim)
    bo = jax.random.uniform(kb, (query_dim,), jnp.float32,
                            -1.0 / math.sqrt(inner_dim), 1.0 / math.sqrt(inner_dim))

    # Small tiles on purpose so the (batch, q-tile, kv-tile) flash path is exercised
    # (grid = (2, 2, 2)); production shapes would use the 256/512 defaults.
    out = cross_attention(x, context, wq, wk, wv, wo, bo,
                          heads=heads, dim_head=dim_head, tile_n=8, tile_m=8)
    out = jax.block_until_ready(out)

    ref = cross_attention_ref(x, context, wq, wk, wv, wo, bo,
                              heads=heads, dim_head=dim_head)
    assert out.shape == (batch, seq, query_dim)
    # EUP approx reciprocal + online-softmax accumulation order change results at
    # the ~1e-3 level vs. the plain-softmax f32 reference.
    assert jnp.allclose(out, ref, atol=2e-3, rtol=2e-3), "mismatch vs JAX reference"

    print("KERNEL_OK")
</pallas_src>

<mosaic_0001>
module attributes {stable_mosaic.version = 11 : i64} {
  func.func @cross_attn_kernel(%arg0: i32, %arg1: i32, %arg2: i32, %arg3: memref<1x8x32xf32, #tpu.memory_space<vmem>>, %arg4: memref<1x8x32xf32, #tpu.memory_space<vmem>>, %arg5: memref<2x32x16xf32, #tpu.memory_space<vmem>>, %arg6: memref<2x32x16xf32, #tpu.memory_space<vmem>>, %arg7: memref<2x32x16xf32, #tpu.memory_space<vmem>>, %arg8: memref<2x16x32xf32, #tpu.memory_space<vmem>>, %arg9: memref<1x32xf32, #tpu.memory_space<vmem>>, %arg10: memref<1x8x32xf32, #tpu.memory_space<vmem>>, %arg11: memref<2x8x16xf32, #tpu.memory_space<vmem>>, %arg12: memref<2x8x1xf32, #tpu.memory_space<vmem>>, %arg13: memref<2x8x1xf32, #tpu.memory_space<vmem>>, %arg14: memref<2x8x16xf32, #tpu.memory_space<vmem>>) attributes {dimension_semantics = [#tpu.dimension_semantics<parallel>, #tpu.dimension_semantics<parallel>, #tpu.dimension_semantics<arbitrary>], iteration_bounds = array<i64: 2, 2, 2>, scalar_prefetch = 0 : i64, scratch_operands = 4 : i64, tpu.core_type = #tpu.core_type<tc>, window_params = [{transform_indices = @transform_0, window_bounds = array<i64: 1, 8, 32>}, {transform_indices = @transform_1, window_bounds = array<i64: 1, 8, 32>}, {pipeline_mode = #tpu.pipeline_mode<synchronous>, transform_indices = @transform_2, window_bounds = array<i64: 2, 32, 16>}, {pipeline_mode = #tpu.pipeline_mode<synchronous>, transform_indices = @transform_3, window_bounds = array<i64: 2, 32, 16>}, {pipeline_mode = #tpu.pipeline_mode<synchronous>, transform_indices = @transform_4, window_bounds = array<i64: 2, 32, 16>}, {pipeline_mode = #tpu.pipeline_mode<synchronous>, transform_indices = @transform_5, window_bounds = array<i64: 2, 16, 32>}, {pipeline_mode = #tpu.pipeline_mode<synchronous>, transform_indices = @transform_6, window_bounds = array<i64: 1, 32>}, {transform_indices = @transform_7, window_bounds = array<i64: 1, 8, 32>}]} {
    %c0_i32 = arith.constant 0 : i32
    %0 = arith.cmpi eq, %arg2, %c0_i32 : i32
    %1 = arith.extui %0 : i1 to i32
    %c0_i32_0 = arith.constant 0 : i32
    %2 = arith.cmpi ne, %1, %c0_i32_0 : i32
    scf.if %2 {
      %c0_68 = arith.constant 0 : index
      %c0_69 = arith.constant 0 : index
      %c0_70 = arith.constant 0 : index
      %88 = vector.load %arg3[%c0_68, %c0_69, %c0_70] : memref<1x8x32xf32, #tpu.memory_space<vmem>>, vector<1x8x32xf32>
      %89 = vector.shape_cast %88 : vector<1x8x32xf32> to vector<8x32xf32>
      %c0_71 = arith.constant 0 : index
      %c0_72 = arith.constant 0 : index
      %c0_73 = arith.constant 0 : index
      %90 = vector.load %arg5[%c0_71, %c0_72, %c0_73] : memref<2x32x16xf32, #tpu.memory_space<vmem>>, vector<1x32x16xf32>
      %91 = vector.shape_cast %90 : vector<1x32x16xf32> to vector<32x16xf32>
      %cst_74 = arith.constant dense<0.000000e+00> : vector<8x16xf32>
      %92 = tpu.matmul %89, %91, %cst_74 {dimension_numbers = #tpu.dot_dimension_numbers<[1], [0], [0], [1], [0, 0, 1, 1], [], []>} : vector<8x32xf32>, vector<32x16xf32>, vector<8x16xf32> -> vector<8x16xf32>
      %cst_75 = arith.constant 2.500000e-01 : f32
      %93 = vector.broadcast %cst_75 : f32 to vector<8x16xf32>
      %94 = arith.mulf %93, %92 : vector<8x16xf32>
      %c0_76 = arith.constant 0 : index
      %c0_77 = arith.constant 0 : index
      %c0_78 = arith.constant 0 : index
      %95 = vector.load %arg11[%c0_76, %c0_77, %c0_78] : memref<2x8x16xf32, #tpu.memory_space<vmem>>, vector<1x8x16xf32>
      %96 = vector.shape_cast %95 : vector<1x8x16xf32> to vector<8x16xf32>
      %97 = vector.shape_cast %94 : vector<8x16xf32> to vector<1x8x16xf32>
      tpu.vector_store %arg11[%c0_76, %c0_77, %c0_78], %97 {strides = array<i32>} : memref<2x8x16xf32, #tpu.memory_space<vmem>>, vector<1x8x16xf32>,
      %c1_79 = arith.constant 1 : index
      %c0_80 = arith.constant 0 : index
      %c0_81 = arith.constant 0 : index
      %98 = vector.load %arg5[%c1_79, %c0_80, %c0_81] : memref<2x32x16xf32, #tpu.memory_space<vmem>>, vector<1x32x16xf32>
      %99 = vector.shape_cast %98 : vector<1x32x16xf32> to vector<32x16xf32>
      %cst_82 = arith.constant dense<0.000000e+00> : vector<8x16xf32>
      %100 = tpu.matmul %89, %99, %cst_82 {dimension_numbers = #tpu.dot_dimension_numbers<[1], [0], [0], [1], [0, 0, 1, 1], [], []>} : vector<8x32xf32>, vector<32x16xf32>, vector<8x16xf32> -> vector<8x16xf32>
      %cst_83 = arith.constant 2.500000e-01 : f32
      %101 = vector.broadcast %cst_83 : f32 to vector<8x16xf32>
      %102 = arith.mulf %101, %100 : vector<8x16xf32>
      %c1_84 = arith.constant 1 : index
      %c0_85 = arith.constant 0 : index
      %c0_86 = arith.constant 0 : index
      %103 = vector.load %arg11[%c1_84, %c0_85, %c0_86] : memref<2x8x16xf32, #tpu.memory_space<vmem>>, vector<1x8x16xf32>
      %104 = vector.shape_cast %103 : vector<1x8x16xf32> to vector<8x16xf32>
      %105 = vector.shape_cast %102 : vector<8x16xf32> to vector<1x8x16xf32>
      tpu.vector_store %arg11[%c1_84, %c0_85, %c0_86], %105 {strides = array<i32>} : memref<2x8x16xf32, #tpu.memory_space<vmem>>, vector<1x8x16xf32>,
      %cst_87 = arith.constant 0xFF800000 : f32
      %106 = vector.broadcast %cst_87 : f32 to vector<2x8x1xf32>
      %c0_88 = arith.constant 0 : index
      %c0_89 = arith.constant 0 : index
      %c0_90 = arith.constant 0 : index
      %107 = vector.load %arg12[%c0_88, %c0_89, %c0_90] : memref<2x8x1xf32, #tpu.memory_space<vmem>>, vector<2x8x1xf32>
      tpu.vector_store %arg12[%c0_88, %c0_89, %c0_90], %106 {strides = array<i32>} : memref<2x8x1xf32, #tpu.memory_space<vmem>>, vector<2x8x1xf32>,
      %cst_91 = arith.constant 0.000000e+00 : f32
      %108 = vector.broadcast %cst_91 : f32 to vector<2x8x1xf32>
      %c0_92 = arith.constant 0 : index
      %c0_93 = arith.constant 0 : index
      %c0_94 = arith.constant 0 : index
      %109 = vector.load %arg13[%c0_92, %c0_93, %c0_94] : memref<2x8x1xf32, #tpu.memory_space<vmem>>, vector<2x8x1xf32>
      tpu.vector_store %arg13[%c0_92, %c0_93, %c0_94], %108 {strides = array<i32>} : memref<2x8x1xf32, #tpu.memory_space<vmem>>, vector<2x8x1xf32>,
      %cst_95 = arith.constant 0.000000e+00 : f32
      %110 = vector.broadcast %cst_95 : f32 to vector<2x8x16xf32>
      %c0_96 = arith.constant 0 : index
      %c0_97 = arith.constant 0 : index
      %c0_98 = arith.constant 0 : index
      %111 = vector.load %arg14[%c0_96, %c0_97, %c0_98] : memref<2x8x16xf32, #tpu.memory_space<vmem>>, vector<2x8x16xf32>
      tpu.vector_store %arg14[%c0_96, %c0_97, %c0_98], %110 {strides = array<i32>} : memref<2x8x16xf32, #tpu.memory_space<vmem>>, vector<2x8x16xf32>,
    } else {
    }
    %c0 = arith.constant 0 : index
    %c0_1 = arith.constant 0 : index
    %c0_2 = arith.constant 0 : index
    %3 = vector.load %arg4[%c0, %c0_1, %c0_2] : memref<1x8x32xf32, #tpu.memory_space<vmem>>, vector<1x8x32xf32>
    %4 = vector.shape_cast %3 : vector<1x8x32xf32> to vector<8x32xf32>
    %c0_3 = arith.constant 0 : index
    %c0_4 = arith.constant 0 : index
    %c0_5 = arith.constant 0 : index
    %5 = vector.load %arg6[%c0_3, %c0_4, %c0_5] : memref<2x32x16xf32, #tpu.memory_space<vmem>>, vector<1x32x16xf32>
    %6 = vector.shape_cast %5 : vector<1x32x16xf32> to vector<32x16xf32>
    %cst = arith.constant dense<0.000000e+00> : vector<8x16xf32>
    %7 = tpu.matmul %4, %6, %cst {dimension_numbers = #tpu.dot_dimension_numbers<[1], [0], [0], [1], [0, 0, 1, 1], [], []>} : vector<8x32xf32>, vector<32x16xf32>, vector<8x16xf32> -> vector<8x16xf32>
    %c0_6 = arith.constant 0 : index
    %c0_7 = arith.constant 0 : index
    %c0_8 = arith.constant 0 : index
    %8 = vector.load %arg7[%c0_6, %c0_7, %c0_8] : memref<2x32x16xf32, #tpu.memory_space<vmem>>, vector<1x32x16xf32>
    %9 = vector.shape_cast %8 : vector<1x32x16xf32> to vector<32x16xf32>
    %cst_9 = arith.constant dense<0.000000e+00> : vector<8x16xf32>
    %10 = tpu.matmul %4, %9, %cst_9 {dimension_numbers = #tpu.dot_dimension_numbers<[1], [0], [0], [1], [0, 0, 1, 1], [], []>} : vector<8x32xf32>, vector<32x16xf32>, vector<8x16xf32> -> vector<8x16xf32>
    %c0_10 = arith.constant 0 : index
    %c0_11 = arith.constant 0 : index
    %c0_12 = arith.constant 0 : index
    %11 = vector.load %arg11[%c0_10, %c0_11, %c0_12] : memref<2x8x16xf32, #tpu.memory_space<vmem>>, vector<1x8x16xf32>
    %12 = vector.shape_cast %11 : vector<1x8x16xf32> to vector<8x16xf32>
    %cst_13 = arith.constant dense<0.000000e+00> : vector<8x8xf32>
    %13 = tpu.matmul %12, %7, %cst_13 {dimension_numbers = #tpu.dot_dimension_numbers<[1], [1], [0], [0], [0, 0, 1, 0], [], []>} : vector<8x16xf32>, vector<8x16xf32>, vector<8x8xf32> -> vector<8x8xf32>
    %c0_14 = arith.constant 0 : index
    %c0_15 = arith.constant 0 : index
    %c0_16 = arith.constant 0 : index
    %14 = vector.load %arg12[%c0_14, %c0_15, %c0_16] : memref<2x8x1xf32, #tpu.memory_space<vmem>>, vector<1x8x1xf32>
    %15 = vector.shape_cast %14 : vector<1x8x1xf32> to vector<8x1xf32>
    %cst_17 = arith.constant dense<0xFF800000> : vector<8xf32>
    %16 = vector.multi_reduction <maximumf>, %13, %cst_17 [1] : vector<8x8xf32> to vector<8xf32>
    %17 = vector.shape_cast %16 : vector<8xf32> to vector<8x1xf32>
    %18 = arith.maximumf %15, %17 : vector<8x1xf32>
    %19 = arith.subf %15, %18 : vector<8x1xf32>
    %20 = math.exp %19 : vector<8x1xf32>
    %21 = vector.broadcast %18 : vector<8x1xf32> to vector<8x8xf32>
    %22 = arith.subf %13, %21 : vector<8x8xf32>
    %23 = math.exp %22 : vector<8x8xf32>
    %c0_18 = arith.constant 0 : index
    %c0_19 = arith.constant 0 : index
    %c0_20 = arith.constant 0 : index
    %24 = vector.load %arg13[%c0_18, %c0_19, %c0_20] : memref<2x8x1xf32, #tpu.memory_space<vmem>>, vector<1x8x1xf32>
    %25 = vector.shape_cast %24 : vector<1x8x1xf32> to vector<8x1xf32>
    %26 = arith.mulf %20, %25 : vector<8x1xf32>
    %cst_21 = arith.constant dense<0.000000e+00> : vector<8xf32>
    %27 = vector.multi_reduction <add>, %23, %cst_21 [1] : vector<8x8xf32> to vector<8xf32>
    %28 = vector.shape_cast %27 : vector<8xf32> to vector<8x1xf32>
    %29 = arith.addf %26, %28 : vector<8x1xf32>
    %c0_22 = arith.constant 0 : index
    %c0_23 = arith.constant 0 : index
    %c0_24 = arith.constant 0 : index
    %30 = vector.load %arg13[%c0_22, %c0_23, %c0_24] : memref<2x8x1xf32, #tpu.memory_space<vmem>>, vector<1x8x1xf32>
    %31 = vector.shape_cast %30 : vector<1x8x1xf32> to vector<8x1xf32>
    %32 = vector.shape_cast %29 : vector<8x1xf32> to vector<1x8x1xf32>
    tpu.vector_store %arg13[%c0_22, %c0_23, %c0_24], %32 {strides = array<i32>} : memref<2x8x1xf32, #tpu.memory_space<vmem>>, vector<1x8x1xf32>,
    %c0_25 = arith.constant 0 : index
    %c0_26 = arith.constant 0 : index
    %c0_27 = arith.constant 0 : index
    %33 = vector.load %arg14[%c0_25, %c0_26, %c0_27] : memref<2x8x16xf32, #tpu.memory_space<vmem>>, vector<1x8x16xf32>
    %34 = vector.shape_cast %33 : vector<1x8x16xf32> to vector<8x16xf32>
    %35 = vector.broadcast %20 : vector<8x1xf32> to vector<8x16xf32>
    %36 = arith.mulf %35, %34 : vector<8x16xf32>
    %cst_28 = arith.constant dense<0.000000e+00> : vector<8x16xf32>
    %37 = tpu.matmul %23, %10, %cst_28 {dimension_numbers = #tpu.dot_dimension_numbers<[1], [0], [0], [1], [0, 0, 1, 1], [], []>} : vector<8x8xf32>, vector<8x16xf32>, vector<8x16xf32> -> vector<8x16xf32>
    %38 = arith.addf %36, %37 : vector<8x16xf32>
    %c0_29 = arith.constant 0 : index
    %c0_30 = arith.constant 0 : index
    %c0_31 = arith.constant 0 : index
    %39 = vector.load %arg14[%c0_29, %c0_30, %c0_31] : memref<2x8x16xf32, #tpu.memory_space<vmem>>, vector<1x8x16xf32>
    %40 = vector.shape_cast %39 : vector<1x8x16xf32> to vector<8x16xf32>
    %41 = vector.shape_cast %38 : vector<8x16xf32> to vector<1x8x16xf32>
    tpu.vector_store %arg14[%c0_29, %c0_30, %c0_31], %41 {strides = array<i32>} : memref<2x8x16xf32, #tpu.memory_space<vmem>>, vector<1x8x16xf32>,
    %c0_32 = arith.constant 0 : index
    %c0_33 = arith.constant 0 : index
    %c0_34 = arith.constant 0 : index
    %42 = vector.load %arg12[%c0_32, %c0_33, %c0_34] : memref<2x8x1xf32, #tpu.memory_space<vmem>>, vector<1x8x1xf32>
    %43 = vector.shape_cast %42 : vector<1x8x1xf32> to vector<8x1xf32>
    %44 = vector.shape_cast %18 : vector<8x1xf32> to vector<1x8x1xf32>
    tpu.vector_store %arg12[%c0_32, %c0_33, %c0_34], %44 {strides = array<i32>} : memref<2x8x1xf32, #tpu.memory_space<vmem>>, vector<1x8x1xf32>,
    %c1 = arith.constant 1 : index
    %c0_35 = arith.constant 0 : index
    %c0_36 = arith.constant 0 : index
    %45 = vector.load %arg6[%c1, %c0_35, %c0_36] : memref<2x32x16xf32, #tpu.memory_space<vmem>>, vector<1x32x16xf32>
    %46 = vector.shape_cast %45 : vector<1x32x16xf32> to vector<32x16xf32>
    %cst_37 = arith.constant dense<0.000000e+00> : vector<8x16xf32>
    %47 = tpu.matmul %4, %46, %cst_37 {dimension_numbers = #tpu.dot_dimension_numbers<[1], [0], [0], [1], [0, 0, 1, 1], [], []>} : vector<8x32xf32>, vector<32x16xf32>, vector<8x16xf32> -> vector<8x16xf32>
    %c1_38 = arith.constant 1 : index
    %c0_39 = arith.constant 0 : index
    %c0_40 = arith.constant 0 : index
    %48 = vector.load %arg7[%c1_38, %c0_39, %c0_40] : memref<2x32x16xf32, #tpu.memory_space<vmem>>, vector<1x32x16xf32>
    %49 = vector.shape_cast %48 : vector<1x32x16xf32> to vector<32x16xf32>
    %cst_41 = arith.constant dense<0.000000e+00> : vector<8x16xf32>
    %50 = tpu.matmul %4, %49, %cst_41 {dimension_numbers = #tpu.dot_dimension_numbers<[1], [0], [0], [1], [0, 0, 1, 1], [], []>} : vector<8x32xf32>, vector<32x16xf32>, vector<8x16xf32> -> vector<8x16xf32>
    %c1_42 = arith.constant 1 : index
    %c0_43 = arith.constant 0 : index
    %c0_44 = arith.constant 0 : index
    %51 = vector.load %arg11[%c1_42, %c0_43, %c0_44] : memref<2x8x16xf32, #tpu.memory_space<vmem>>, vector<1x8x16xf32>
    %52 = vector.shape_cast %51 : vector<1x8x16xf32> to vector<8x16xf32>
    %cst_45 = arith.constant dense<0.000000e+00> : vector<8x8xf32>
    %53 = tpu.matmul %52, %47, %cst_45 {dimension_numbers = #tpu.dot_dimension_numbers<[1], [1], [0], [0], [0, 0, 1, 0], [], []>} : vector<8x16xf32>, vector<8x16xf32>, vector<8x8xf32> -> vector<8x8xf32>
    %c1_46 = arith.constant 1 : index
    %c0_47 = arith.constant 0 : index
    %c0_48 = arith.constant 0 : index
    %54 = vector.load %arg12[%c1_46, %c0_47, %c0_48] : memref<2x8x1xf32, #tpu.memory_space<vmem>>, vector<1x8x1xf32>
    %55 = vector.shape_cast %54 : vector<1x8x1xf32> to vector<8x1xf32>
    %cst_49 = arith.constant dense<0xFF800000> : vector<8xf32>
    %56 = vector.multi_reduction <maximumf>, %53, %cst_49 [1] : vector<8x8xf32> to vector<8xf32>
    %57 = vector.shape_cast %56 : vector<8xf32> to vector<8x1xf32>
    %58 = arith.maximumf %55, %57 : vector<8x1xf32>
    %59 = arith.subf %55, %58 : vector<8x1xf32>
    %60 = math.exp %59 : vector<8x1xf32>
    %61 = vector.broadcast %58 : vector<8x1xf32> to vector<8x8xf32>
    %62 = arith.subf %53, %61 : vector<8x8xf32>
    %63 = math.exp %62 : vector<8x8xf32>
    %c1_50 = arith.constant 1 : index
    %c0_51 = arith.constant 0 : index
    %c0_52 = arith.constant 0 : index
    %64 = vector.load %arg13[%c1_50, %c0_51, %c0_52] : memref<2x8x1xf32, #tpu.memory_space<vmem>>, vector<1x8x1xf32>
    %65 = vector.shape_cast %64 : vector<1x8x1xf32> to vector<8x1xf32>
    %66 = arith.mulf %60, %65 : vector<8x1xf32>
    %cst_53 = arith.constant dense<0.000000e+00> : vector<8xf32>
    %67 = vector.multi_reduction <add>, %63, %cst_53 [1] : vector<8x8xf32> to vector<8xf32>
    %68 = vector.shape_cast %67 : vector<8xf32> to vector<8x1xf32>
    %69 = arith.addf %66, %68 : vector<8x1xf32>
    %c1_54 = arith.constant 1 : index
    %c0_55 = arith.constant 0 : index
    %c0_56 = arith.constant 0 : index
    %70 = vector.load %arg13[%c1_54, %c0_55, %c0_56] : memref<2x8x1xf32, #tpu.memory_space<vmem>>, vector<1x8x1xf32>
    %71 = vector.shape_cast %70 : vector<1x8x1xf32> to vector<8x1xf32>
    %72 = vector.shape_cast %69 : vector<8x1xf32> to vector<1x8x1xf32>
    tpu.vector_store %arg13[%c1_54, %c0_55, %c0_56], %72 {strides = array<i32>} : memref<2x8x1xf32, #tpu.memory_space<vmem>>, vector<1x8x1xf32>,
    %c1_57 = arith.constant 1 : index
    %c0_58 = arith.constant 0 : index
    %c0_59 = arith.constant 0 : index
    %73 = vector.load %arg14[%c1_57, %c0_58, %c0_59] : memref<2x8x16xf32, #tpu.memory_space<vmem>>, vector<1x8x16xf32>
    %74 = vector.shape_cast %73 : vector<1x8x16xf32> to vector<8x16xf32>
    %75 = vector.broadcast %60 : vector<8x1xf32> to vector<8x16xf32>
    %76 = arith.mulf %75, %74 : vector<8x16xf32>
    %cst_60 = arith.constant dense<0.000000e+00> : vector<8x16xf32>
    %77 = tpu.matmul %63, %50, %cst_60 {dimension_numbers = #tpu.dot_dimension_numbers<[1], [0], [0], [1], [0, 0, 1, 1], [], []>} : vector<8x8xf32>, vector<8x16xf32>, vector<8x16xf32> -> vector<8x16xf32>
    %78 = arith.addf %76, %77 : vector<8x16xf32>
    %c1_61 = arith.constant 1 : index
    %c0_62 = arith.constant 0 : index
    %c0_63 = arith.constant 0 : index
    %79 = vector.load %arg14[%c1_61, %c0_62, %c0_63] : memref<2x8x16xf32, #tpu.memory_space<vmem>>, vector<1x8x16xf32>
    %80 = vector.shape_cast %79 : vector<1x8x16xf32> to vector<8x16xf32>
    %81 = vector.shape_cast %78 : vector<8x16xf32> to vector<1x8x16xf32>
    tpu.vector_store %arg14[%c1_61, %c0_62, %c0_63], %81 {strides = array<i32>} : memref<2x8x16xf32, #tpu.memory_space<vmem>>, vector<1x8x16xf32>,
    %c1_64 = arith.constant 1 : index
    %c0_65 = arith.constant 0 : index
    %c0_66 = arith.constant 0 : index
    %82 = vector.load %arg12[%c1_64, %c0_65, %c0_66] : memref<2x8x1xf32, #tpu.memory_space<vmem>>, vector<1x8x1xf32>
    %83 = vector.shape_cast %82 : vector<1x8x1xf32> to vector<8x1xf32>
    %84 = vector.shape_cast %58 : vector<8x1xf32> to vector<1x8x1xf32>
    tpu.vector_store %arg12[%c1_64, %c0_65, %c0_66], %84 {strides = array<i32>} : memref<2x8x1xf32, #tpu.memory_space<vmem>>, vector<1x8x1xf32>,
    %c1_i32 = arith.constant 1 : i32
    %85 = arith.cmpi eq, %arg2, %c1_i32 : i32
    %86 = arith.extui %85 : i1 to i32
    %c0_i32_67 = arith.constant 0 : i32
    %87 = arith.cmpi ne, %86, %c0_i32_67 : i32
    scf.if %87 {
      %cst_68 = arith.constant 0.000000e+00 : f32
      %88 = vector.broadcast %cst_68 : f32 to vector<8x32xf32>
      %c0_69 = arith.constant 0 : index
      %c0_70 = arith.constant 0 : index
      %c0_71 = arith.constant 0 : index
      %89 = vector.load %arg14[%c0_69, %c0_70, %c0_71] : memref<2x8x16xf32, #tpu.memory_space<vmem>>, vector<1x8x16xf32>
      %90 = vector.shape_cast %89 : vector<1x8x16xf32> to vector<8x16xf32>
      %c0_72 = arith.constant 0 : index
      %c0_73 = arith.constant 0 : index
      %c0_74 = arith.constant 0 : index
      %91 = vector.load %arg13[%c0_72, %c0_73, %c0_74] : memref<2x8x1xf32, #tpu.memory_space<vmem>>, vector<1x8x1xf32>
      %92 = vector.shape_cast %91 : vector<1x8x1xf32> to vector<8x1xf32>
      %93 = tpu.reciprocal %92 {approx = true} : vector<8x1xf32> -> vector<8x1xf32>
      %94 = vector.broadcast %93 : vector<8x1xf32> to vector<8x16xf32>
      %95 = arith.mulf %90, %94 : vector<8x16xf32>
      %c0_75 = arith.constant 0 : index
      %c0_76 = arith.constant 0 : index
      %c0_77 = arith.constant 0 : index
      %96 = vector.load %arg8[%c0_75, %c0_76, %c0_77] : memref<2x16x32xf32, #tpu.memory_space<vmem>>, vector<1x16x32xf32>
      %97 = vector.shape_cast %96 : vector<1x16x32xf32> to vector<16x32xf32>
      %cst_78 = arith.constant dense<0.000000e+00> : vector<8x32xf32>
      %98 = tpu.matmul %95, %97, %cst_78 {dimension_numbers = #tpu.dot_dimension_numbers<[1], [0], [0], [1], [0, 0, 1, 1], [], []>} : vector<8x16xf32>, vector<16x32xf32>, vector<8x32xf32> -> vector<8x32xf32>
      %99 = arith.addf %88, %98 : vector<8x32xf32>
      %c1_79 = arith.constant 1 : index
      %c0_80 = arith.constant 0 : index
      %c0_81 = arith.constant 0 : index
      %100 = vector.load %arg14[%c1_79, %c0_80, %c0_81] : memref<2x8x16xf32, #tpu.memory_space<vmem>>, vector<1x8x16xf32>
      %101 = vector.shape_cast %100 : vector<1x8x16xf32> to vector<8x16xf32>
      %c1_82 = arith.constant 1 : index
      %c0_83 = arith.constant 0 : index
      %c0_84 = arith.constant 0 : index
      %102 = vector.load %arg13[%c1_82, %c0_83, %c0_84] : memref<2x8x1xf32, #tpu.memory_space<vmem>>, vector<1x8x1xf32>
      %103 = vector.shape_cast %102 : vector<1x8x1xf32> to vector<8x1xf32>
      %104 = tpu.reciprocal %103 {approx = true} : vector<8x1xf32> -> vector<8x1xf32>
      %105 = vector.broadcast %104 : vector<8x1xf32> to vector<8x16xf32>
      %106 = arith.mulf %101, %105 : vector<8x16xf32>
      %c1_85 = arith.constant 1 : index
      %c0_86 = arith.constant 0 : index
      %c0_87 = arith.constant 0 : index
      %107 = vector.load %arg8[%c1_85, %c0_86, %c0_87] : memref<2x16x32xf32, #tpu.memory_space<vmem>>, vector<1x16x32xf32>
      %108 = vector.shape_cast %107 : vector<1x16x32xf32> to vector<16x32xf32>
      %cst_88 = arith.constant dense<0.000000e+00> : vector<8x32xf32>
      %109 = tpu.matmul %106, %108, %cst_88 {dimension_numbers = #tpu.dot_dimension_numbers<[1], [0], [0], [1], [0, 0, 1, 1], [], []>} : vector<8x16xf32>, vector<16x32xf32>, vector<8x32xf32> -> vector<8x32xf32>
      %110 = arith.addf %99, %109 : vector<8x32xf32>
      %c0_89 = arith.constant 0 : index
      %c0_90 = arith.constant 0 : index
      %111 = vector.load %arg9[%c0_89, %c0_90] : memref<1x32xf32, #tpu.memory_space<vmem>>, vector<1x32xf32>
      %112 = vector.broadcast %111 : vector<1x32xf32> to vector<8x32xf32>
      %113 = arith.addf %110, %112 : vector<8x32xf32>
      %c0_91 = arith.constant 0 : index
      %c0_92 = arith.constant 0 : index
      %c0_93 = arith.constant 0 : index
      %114 = vector.load %arg10[%c0_91, %c0_92, %c0_93] : memref<1x8x32xf32, #tpu.memory_space<vmem>>, vector<1x8x32xf32>
      %115 = vector.shape_cast %114 : vector<1x8x32xf32> to vector<8x32xf32>
      %116 = vector.shape_cast %113 : vector<8x32xf32> to vector<1x8x32xf32>
      tpu.vector_store %arg10[%c0_91, %c0_92, %c0_93], %116 {strides = array<i32>} : memref<1x8x32xf32, #tpu.memory_space<vmem>>, vector<1x8x32xf32>,
    } else {
    }
    return
  }
  func.func @transform_0(%arg0: i32, %arg1: i32, %arg2: i32) -> (i32, i32, i32) {
    %c0_i32 = arith.constant 0 : i32
    %c0_i32_0 = arith.constant 0 : i32
    return %arg0, %arg1, %c0_i32 : i32, i32, i32
  }
  func.func @transform_1(%arg0: i32, %arg1: i32, %arg2: i32) -> (i32, i32, i32) {
    %c0_i32 = arith.constant 0 : i32
    %c0_i32_0 = arith.constant 0 : i32
    return %arg0, %arg2, %c0_i32 : i32, i32, i32
  }
  func.func @transform_2(%arg0: i32, %arg1: i32, %arg2: i32) -> (i32, i32, i32) {
    %c0_i32 = arith.constant 0 : i32
    %c0_i32_0 = arith.constant 0 : i32
    %c0_i32_1 = arith.constant 0 : i32
    %c0_i32_2 = arith.constant 0 : i32
    return %c0_i32, %c0_i32_0, %c0_i32_1 : i32, i32, i32
  }
  func.func @transform_3(%arg0: i32, %arg1: i32, %arg2: i32) -> (i32, i32, i32) {
    %c0_i32 = arith.constant 0 : i32
    %c0_i32_0 = arith.constant 0 : i32
    %c0_i32_1 = arith.constant 0 : i32
    %c0_i32_2 = arith.constant 0 : i32
    return %c0_i32, %c0_i32_0, %c0_i32_1 : i32, i32, i32
  }
  func.func @transform_4(%arg0: i32, %arg1: i32, %arg2: i32) -> (i32, i32, i32) {
    %c0_i32 = arith.constant 0 : i32
    %c0_i32_0 = arith.constant 0 : i32
    %c0_i32_1 = arith.constant 0 : i32
    %c0_i32_2 = arith.constant 0 : i32
    return %c0_i32, %c0_i32_0, %c0_i32_1 : i32, i32, i32
  }
  func.func @transform_5(%arg0: i32, %arg1: i32, %arg2: i32) -> (i32, i32, i32) {
    %c0_i32 = arith.constant 0 : i32
    %c0_i32_0 = arith.constant 0 : i32
    %c0_i32_1 = arith.constant 0 : i32
    %c0_i32_2 = arith.constant 0 : i32
    return %c0_i32, %c0_i32_0, %c0_i32_1 : i32, i32, i32
  }
  func.func @transform_6(%arg0: i32, %arg1: i32, %arg2: i32) -> (i32, i32) {
    %c0_i32 = arith.constant 0 : i32
    %c0_i32_0 = arith.constant 0 : i32
    %c0_i32_1 = arith.constant 0 : i32
    return %c0_i32, %c0_i32_0 : i32, i32
  }
  func.func @transform_7(%arg0: i32, %arg1: i32, %arg2: i32) -> (i32, i32, i32) {
    %c0_i32 = arith.constant 0 : i32
    %c0_i32_0 = arith.constant 0 : i32
    return %arg0, %arg1, %c0_i32 : i32, i32, i32
  }
}

</mosaic_0001>

<llo_original>
// kernel: tpu_custom_call.1
$region0: #{tpu_custom_call.1}
  #allocation0 [shape = 'u32[]', space=smem, size = 0x4, offset = 0x4, fixed_abs, tag = 'smem constant byte address 0x4 - core index']
  #allocation1 [shape = 'u32[144,128]{1,0:T(1,128)}', space=vmem, size = 0x12000, scoped, tag = 'internal scratch']
  #allocation2 [shape = 'f32[2,8,16]{2,1,0:T(8,128)}', space=vmem, size = 0x2000, scoped, tag = 'scratch operand']
  #allocation3 [shape = 'f32[2,8,1]{2,1,0:T(8,128)}', space=vmem, size = 0x2000, scoped, tag = 'scratch operand']
  #allocation4 [shape = 'f32[2,8,1]{2,1,0:T(8,128)}', space=vmem, size = 0x2000, scoped, tag = 'scratch operand']
  #allocation5 [shape = 'f32[2,8,16]{2,1,0:T(8,128)}', space=vmem, size = 0x2000, scoped, tag = 'scratch operand']
  %s0 = inlined_call_operand.vmem [shape: f32[2,16,32], index: 0, kind: input, shape index: {}]
  %s1 = inlined_call_operand.vmem [shape: f32[2,16,32], index: 1, kind: input, shape index: {}]
  %s2 = inlined_call_operand.vmem [shape: f32[2,32,16], index: 2, kind: input, shape index: {}]
  %s3 = inlined_call_operand.vmem [shape: f32[2,32,16], index: 3, kind: input, shape index: {}]
  %s4 = inlined_call_operand.vmem [shape: f32[2,32,16], index: 4, kind: input, shape index: {}]
  %s5 = inlined_call_operand.vmem [shape: f32[2,16,32], index: 5, kind: input, shape index: {}]
  %s6 = inlined_call_operand.vmem [shape: f32[1,32], index: 6, kind: input, shape index: {}]
  %s7 = inlined_call_operand.hbm [shape: f32[2,16,32], index: 7, kind: output, shape index: {}]
  %s8 = sld [smem:[#allocation0]]
  $region69: #{tpu_custom_call.1} parent=0
    _
  %s10 = ssub.s32 1, %s8
  %s11 = scalar_select 0, %s10, %s8
  $region1: #{tpu_custom_call.1} parent=0
    #allocation6 [shape = 'u8[8192]{0}', space=vmem, size = 0x2000, scoped, tag = 'output window, operand 0']
    #allocation7 [shape = 's32[2]{0}', space=sflag, size = 0x8, scoped, tag = 'scoped memory for tpu_custom_call.1']
    %12 = vsyncpa [#allocation7], 0
    %s13 = scalar_lea.sflag [#allocation7], 1
    %14 = vsyncpa %s13, 0
    loop: start=0, step=1, limit=10
    $region2: #{tpu_custom_call.1} parent=1 // loop_pre_header
      _
    $region3: #{tpu_custom_call.1} parent=1 // loop_header
      %s16 = sphi 0, %s20
      %p17 = scmp.ge.s32.totalorder %s16, 10
      %s23 = sphi 0, %s42
      %s24 = sphi 0, %s38
      %s25 = sphi 0, %s34
      %s26 = sphi 0, %s23
      %s27 = sphi 0, %s24
      %s28 = sphi 0, %s25
      %s29 = sphi 0, %s26
      %s30 = sphi 0, %s27
      %s31 = sphi 0, %s28
      %s47 = sphi 0, %s49
      %s50 = sphi 0, %s47
      %s51 = sphi 0, %s50
      %s67 = sphi 0, %s51
      %s75 = sphi 0, %s77
      %s78 = sphi 0, %s75
      %s79 = sphi 0, %s78
      %s95 = sphi 0, %s79
      %s99 = sphi 0, %s99
      %s101 = sphi 0, %s99
      %s102 = sphi 0, %s101
      %s116 = sphi 0, %s102
      %s120 = sphi 0, %s120
      %s122 = sphi 0, %s120
      %s123 = sphi 0, %s122
      %s137 = sphi 0, %s123
      %s141 = sphi 0, %s141
      %s143 = sphi 0, %s141
      %s144 = sphi 0, %s143
      %s158 = sphi 0, %s144
      %s162 = sphi 0, %s162
      %s164 = sphi 0, %s162
      %s165 = sphi 0, %s164
      %s179 = sphi 0, %s165
      %s183 = sphi 0, %s183
      %s185 = sphi 0, %s183
      %s186 = sphi 0, %s185
      %s200 = sphi 0, %s186
      %s208 = sphi 0, %s210
      %s211 = sphi 0, %s208
      %s212 = sphi 0, %s211
      %s228 = sphi 0, %s212
    $region4: #{tpu_custom_call.1} parent=1 // loop_header_branch
      %19 = sbr.rel (%p17) target = $region8
    $region5: #{tpu_custom_call.1} parent=1 // loop_body
      %s21 = ssub.s32 %s16, 1
      %s22 = ssub.s32 %s16, 2
      %s32 = sadd.s32 1, %s25
      %p33 = scmp.ge.s32.totalorder %s32, 2
      %s34 = scalar_select %p33, 0, %s32
      %s35 = sadd.s32 1, %s24
      %s36 = scalar_select %p33, %s35, %s24
      %p37 = scmp.ge.s32.totalorder %s36, 2
      %s38 = scalar_select %p37, 0, %s36
      %s39 = sadd.s32 1, %s23
      %s40 = scalar_select %p37, %s39, %s23
      %p41 = scmp.ge.s32.totalorder %s40, 2
      %s42 = scalar_select %p41, 0, %s40
      %s43 = ssub.s32 %s23, %s42
      %s44 = ssub.s32 %s24, %s38
      %s45 = sor.u32 %s43, %s44
      %p46 = scmp.eq.s32.totalorder %s45, 0
      %s48 = sadd.s32 %s47, 1
      %s49 = scalar_select %p46, %s47, %s48
      %p52 = pneg %p46
      %p53 = scmp.eq.s32.totalorder %s16, 7
      %p54 = por %p52, %p53
      %p55 = scmp.ne.s32.totalorder %s47, %s50
      %p56 = scmp.eq.s32.totalorder %s16, 0
      %p57 = por %p55, %p56
      %p58 = scmp.ne.s32.totalorder %s47, %s50
      %p59 = scmp.eq.s32.totalorder %s21, 7
      %p60 = por %p58, %p59
      %p61 = scmp.ne.s32.totalorder %s50, %s51
      %p62 = scmp.eq.s32.totalorder %s21, 0
      %p63 = por %p61, %p62
      %p64 = scmp.ne.s32.totalorder %s50, %s51
      %p65 = scmp.eq.s32.totalorder %s22, 7
      %p66 = por %p64, %p65
      %p68 = scmp.ne.s32.totalorder %s51, %s67
      %p69 = scmp.eq.s32.totalorder %s22, 0
      %p70 = por %p68, %p69
      %s71 = ssub.s32 %s23, %s42
      %s72 = ssub.s32 %s25, %s34
      %s73 = sor.u32 %s71, %s72
      %p74 = scmp.eq.s32.totalorder %s73, 0
      %s76 = sadd.s32 %s75, 1
      %s77 = scalar_select %p74, %s75, %s76
      %p80 = pneg %p74
      %p81 = scmp.eq.s32.totalorder %s16, 7
      %p82 = por %p80, %p81
      %p83 = scmp.ne.s32.totalorder %s75, %s78
      %p84 = scmp.eq.s32.totalorder %s16, 0
      %p85 = por %p83, %p84
      %p86 = scmp.ne.s32.totalorder %s75, %s78
      %p87 = scmp.eq.s32.totalorder %s21, 7
      %p88 = por %p86, %p87
      %p89 = scmp.ne.s32.totalorder %s78, %s79
      %p90 = scmp.eq.s32.totalorder %s21, 0
      %p91 = por %p89, %p90
      %p92 = scmp.ne.s32.totalorder %s78, %s79
      %p93 = scmp.eq.s32.totalorder %s22, 7
      %p94 = por %p92, %p93
      %p96 = scmp.ne.s32.totalorder %s79, %s95
      %p97 = scmp.eq.s32.totalorder %s22, 0
      %p98 = por %p96, %p97
      %s100 = sadd.s32 %s99, 1
      %p103 = scmp.eq.s32.totalorder %s16, 7
      %p104 = scmp.ne.s32.totalorder %s99, %s101
      %p105 = scmp.eq.s32.totalorder %s16, 0
      %p106 = por %p104, %p105
      %p107 = scmp.ne.s32.totalorder %s99, %s101
      %p108 = scmp.eq.s32.totalorder %s21, 7
      %p109 = por %p107, %p108
      %p110 = scmp.ne.s32.totalorder %s101, %s102
      %p111 = scmp.eq.s32.totalorder %s21, 0
      %p112 = por %p110, %p111
      %p113 = scmp.ne.s32.totalorder %s101, %s102
      %p114 = scmp.eq.s32.totalorder %s22, 7
      %p115 = por %p113, %p114
      %p117 = scmp.ne.s32.totalorder %s102, %s116
      %p118 = scmp.eq.s32.totalorder %s22, 0
      %p119 = por %p117, %p118
      %s121 = sadd.s32 %s120, 1
      %p124 = scmp.eq.s32.totalorder %s16, 7
      %p125 = scmp.ne.s32.totalorder %s120, %s122
      %p126 = scmp.eq.s32.totalorder %s16, 0
      %p127 = por %p125, %p126
      %p128 = scmp.ne.s32.totalorder %s120, %s122
      %p129 = scmp.eq.s32.totalorder %s21, 7
      %p130 = por %p128, %p129
      %p131 = scmp.ne.s32.totalorder %s122, %s123
      %p132 = scmp.eq.s32.totalorder %s21, 0
      %p133 = por %p131, %p132
      %p134 = scmp.ne.s32.totalorder %s122, %s123
      %p135 = scmp.eq.s32.totalorder %s22, 7
      %p136 = por %p134, %p135
      %p138 = scmp.ne.s32.totalorder %s123, %s137
      %p139 = scmp.eq.s32.totalorder %s22, 0
      %p140 = por %p138, %p139
      %s142 = sadd.s32 %s141, 1
      %p145 = scmp.eq.s32.totalorder %s16, 7
      %p146 = scmp.ne.s32.totalorder %s141, %s143
      %p147 = scmp.eq.s32.totalorder %s16, 0
      %p148 = por %p146, %p147
      %p149 = scmp.ne.s32.totalorder %s141, %s143
      %p150 = scmp.eq.s32.totalorder %s21, 7
      %p151 = por %p149, %p150
      %p152 = scmp.ne.s32.totalorder %s143, %s144
      %p153 = scmp.eq.s32.totalorder %s21, 0
      %p154 = por %p152, %p153
      %p155 = scmp.ne.s32.totalorder %s143, %s144
      %p156 = scmp.eq.s32.totalorder %s22, 7
      %p157 = por %p155, %p156
      %p159 = scmp.ne.s32.totalorder %s144, %s158
      %p160 = scmp.eq.s32.totalorder %s22, 0
      %p161 = por %p159, %p160
      %s163 = sadd.s32 %s162, 1
      %p166 = scmp.eq.s32.totalorder %s16, 7
      %p167 = scmp.ne.s32.totalorder %s162, %s164
      %p168 = scmp.eq.s32.totalorder %s16, 0
      %p169 = por %p167, %p168
      %p170 = scmp.ne.s32.totalorder %s162, %s164
      %p171 = scmp.eq.s32.totalorder %s21, 7
      %p172 = por %p170, %p171
      %p173 = scmp.ne.s32.totalorder %s164, %s165
      %p174 = scmp.eq.s32.totalorder %s21, 0
      %p175 = por %p173, %p174
      %p176 = scmp.ne.s32.totalorder %s164, %s165
      %p177 = scmp.eq.s32.totalorder %s22, 7
      %p178 = por %p176, %p177
      %p180 = scmp.ne.s32.totalorder %s165, %s179
      %p181 = scmp.eq.s32.totalorder %s22, 0
      %p182 = por %p180, %p181
      %s184 = sadd.s32 %s183, 1
      %p187 = scmp.eq.s32.totalorder %s16, 7
      %p188 = scmp.ne.s32.totalorder %s183, %s185
      %p189 = scmp.eq.s32.totalorder %s16, 0
      %p190 = por %p188, %p189
      %p191 = scmp.ne.s32.totalorder %s183, %s185
      %p192 = scmp.eq.s32.totalorder %s21, 7
      %p193 = por %p191, %p192
      %p194 = scmp.ne.s32.totalorder %s185, %s186
      %p195 = scmp.eq.s32.totalorder %s21, 0
      %p196 = por %p194, %p195
      %p197 = scmp.ne.s32.totalorder %s185, %s186
      %p198 = scmp.eq.s32.totalorder %s22, 7
      %p199 = por %p197, %p198
      %p201 = scmp.ne.s32.totalorder %s186, %s200
      %p202 = scmp.eq.s32.totalorder %s22, 0
      %p203 = por %p201, %p202
      %s204 = ssub.s32 %s23, %s42
      %s205 = ssub.s32 %s24, %s38
      %s206 = sor.u32 %s204, %s205
      %p207 = scmp.eq.s32.totalorder %s206, 0
      %s209 = sadd.s32 %s208, 1
      %s210 = scalar_select %p207, %s208, %s209
      %p213 = pneg %p207
      %p214 = scmp.eq.s32.totalorder %s16, 7
      %p215 = por %p213, %p214
      %p216 = scmp.ne.s32.totalorder %s208, %s211
      %p217 = scmp.eq.s32.totalorder %s16, 0
      %p218 = por %p216, %p217
      %p219 = scmp.ne.s32.totalorder %s208, %s211
      %p220 = scmp.eq.s32.totalorder %s21, 7
      %p221 = por %p219, %p220
      %p222 = scmp.ne.s32.totalorder %s211, %s212
      %p223 = scmp.eq.s32.totalorder %s21, 0
      %p224 = por %p222, %p223
      %p225 = scmp.ne.s32.totalorder %s211, %s212
      %p226 = scmp.eq.s32.totalorder %s22, 7
      %p227 = por %p225, %p226
      %p229 = scmp.ne.s32.totalorder %s212, %s228
      %p230 = scmp.eq.s32.totalorder %s22, 0
      %p231 = por %p229, %p230
      %p232 = scmp.le.s32.totalorder 1, %s16
      %p233 = scmp.lt.s32.totalorder %s16, 9
      %p234 = pnand %p232, %p233
      %p235 = pneg %p234
      // Predicated region
      $region9: #{tpu_custom_call.1} parent=5 // pred_check
        _
      $region10: #{tpu_custom_call.1} parent=5 // pred_check_branch
        %237 = sbr.rel (%p234) target = $region12
      $region11: #{tpu_custom_call.1} parent=5 // pred_region
        %s238 = ssub.s32 %s16, 1
        // Predicated region
        $region13: #{tpu_custom_call.1} parent=11 // pred_check
          %p239 = pneg %p112
        $region14: #{tpu_custom_call.1} parent=11 // pred_check_branch
          %241 = sbr.rel (%p239) target = $region16
        $region15: #{tpu_custom_call.1} parent=11 // pred_region
          _
        $region16: #{tpu_custom_call.1} parent=11 // pred_fallthru
          _
        // Predicated region
        $region17: #{tpu_custom_call.1} parent=11 // pred_check
          %p242 = pneg %p133
        $region18: #{tpu_custom_call.1} parent=11 // pred_check_branch
          %244 = sbr.rel (%p242) target = $region20
        $region19: #{tpu_custom_call.1} parent=11 // pred_region
          _
        $region20: #{tpu_custom_call.1} parent=11 // pred_fallthru
          _
        // Predicated region
        $region21: #{tpu_custom_call.1} parent=11 // pred_check
          %p245 = pneg %p154
        $region22: #{tpu_custom_call.1} parent=11 // pred_check_branch
          %247 = sbr.rel (%p245) target = $region24
        $region23: #{tpu_custom_call.1} parent=11 // pred_region
          _
        $region24: #{tpu_custom_call.1} parent=11 // pred_fallthru
          _
        // Predicated region
        $region25: #{tpu_custom_call.1} parent=11 // pred_check
          %p248 = pneg %p175
        $region26: #{tpu_custom_call.1} parent=11 // pred_check_branch
          %250 = sbr.rel (%p248) target = $region28
        $region27: #{tpu_custom_call.1} parent=11 // pred_region
          _
        $region28: #{tpu_custom_call.1} parent=11 // pred_fallthru
          _
        // Predicated region
        $region29: #{tpu_custom_call.1} parent=11 // pred_check
          %p251 = pneg %p196
        $region30: #{tpu_custom_call.1} parent=11 // pred_check_branch
          %253 = sbr.rel (%p251) target = $region32
        $region31: #{tpu_custom_call.1} parent=11 // pred_region
          _
        $region32: #{tpu_custom_call.1} parent=11 // pred_fallthru
          _
      $region12: #{tpu_custom_call.1} parent=5 // pred_fallthru
        _
      %p254 = scmp.lt.s32.totalorder %s16, 8
      // Predicated region
      $region33: #{tpu_custom_call.1} parent=5 // pred_check
        %p255 = pneg %p254
      $region34: #{tpu_custom_call.1} parent=5 // pred_check_branch
        %257 = sbr.rel (%p255) target = $region36
      $region35: #{tpu_custom_call.1} parent=5 // pred_region
        // Predicated region
        $region37: #{tpu_custom_call.1} parent=35 // pred_check
          %p258 = pneg %p57
        $region38: #{tpu_custom_call.1} parent=35 // pred_check_branch
          %260 = sbr.rel (%p258) target = $region40
        $region39: #{tpu_custom_call.1} parent=35 // pred_region
          %p261 = scmp.lt.s32.totalorder %s23, 1
          %s262 = scalar_select %p261, %s23, 1
          %p263 = scmp.lt.s32.totalorder %s24, 1
          %s264 = scalar_select %p263, %s24, 1
          %s265 = smul.addr %s262, 2
          %s266 = sadd.s32 %s264, %s265
          %s267 = smul.addr %s266, 8
          %s268 = scalar_lea.vmem %s0, %s267
        $region40: #{tpu_custom_call.1} parent=35 // pred_fallthru
          _
        // Predicated region
        $region41: #{tpu_custom_call.1} parent=35 // pred_check
          %p269 = pneg %p85
        $region42: #{tpu_custom_call.1} parent=35 // pred_check_branch
          %271 = sbr.rel (%p269) target = $region44
        $region43: #{tpu_custom_call.1} parent=35 // pred_region
          %p272 = scmp.lt.s32.totalorder %s23, 1
          %s273 = scalar_select %p272, %s23, 1
          %p274 = scmp.lt.s32.totalorder %s25, 1
          %s275 = scalar_select %p274, %s25, 1
          %s276 = smul.addr %s273, 2
          %s277 = sadd.s32 %s275, %s276
          %s278 = smul.addr %s277, 8
          %s279 = scalar_lea.vmem %s1, %s278
        $region44: #{tpu_custom_call.1} parent=35 // pred_fallthru
          _
      $region36: #{tpu_custom_call.1} parent=5 // pred_fallthru
        _
      %p280 = scmp.le.s32.totalorder 1, %s16
      %p281 = scmp.lt.s32.totalorder %s16, 9
      %p282 = pnand %p280, %p281
      %p283 = pneg %p282
      // Predicated region
      $region45: #{tpu_custom_call.1} parent=5 // pred_check
        _
      $region46: #{tpu_custom_call.1} parent=5 // pred_check_branch
        %285 = sbr.rel (%p282) target = $region48
      $region47: #{tpu_custom_call.1} parent=5 // pred_region
        %s286 = ssub.s32 %s16, 1
        %p287 = scmp.lt.s32.totalorder %s26, 1
        %s288 = scalar_select %p287, %s26, 1
        %p289 = scmp.lt.s32.totalorder %s27, 1
        %s290 = scalar_select %p289, %s27, 1
        %s291 = smul.addr %s288, 2
        %s292 = sadd.s32 %s290, %s291
        %s293 = smul.addr %s292, 8
        %s294 = scalar_lea.vmem %s0, %s293
        %p295 = pneg %p63
        %p296 = pneg %p60
        %p297 = scmp.lt.s32.totalorder %s26, 1
        %s298 = scalar_select %p297, %s26, 1
        %p299 = scmp.lt.s32.totalorder %s28, 1
        %s300 = scalar_select %p299, %s28, 1
        %s301 = smul.addr %s298, 2
        %s302 = sadd.s32 %s300, %s301
        %s303 = smul.addr %s302, 8
        %s304 = scalar_lea.vmem %s1, %s303
        %p305 = pneg %p91
        %p306 = pneg %p88
        %p307 = pneg %p112
        %p308 = pneg %p109
        %p309 = pneg %p133
        %p310 = pneg %p130
        %p311 = pneg %p154
        %p312 = pneg %p151
        %p313 = pneg %p175
        %p314 = pneg %p172
        %p315 = pneg %p196
        %p316 = pneg %p193
        %p317 = pneg %p224
        %p318 = pneg %p221
        %s319 = sand.u32 %s211, 1
        %s320 = scalar_lea.sflag [#allocation7], %s319
        %s321 = sand.u32 %s211, 1
        %s322 = smul.addr %s321, 8
        %s323 = scalar_lea.vmem [#allocation6], %s322
        %p324 = scmp.lt.s32.totalorder %s26, 1
        %s325 = scalar_select %p324, %s26, 1
        %p326 = scmp.lt.s32.totalorder %s27, 1
        %s327 = scalar_select %p326, %s27, 1
        %s328 = smul.addr %s325, 2
        %s329 = sadd.s32 %s327, %s328
        %s330 = smul.addr %s329, 8
        %s331 = scalar_lea.vmem %s0, %s330
        %p332 = scmp.lt.s32.totalorder %s26, 1
        %s333 = scalar_select %p332, %s26, 1
        %p334 = scmp.lt.s32.totalorder %s28, 1
        %s335 = scalar_select %p334, %s28, 1
        %s336 = smul.addr %s333, 2
        %s337 = sadd.s32 %s335, %s336
        %s338 = smul.addr %s337, 8
        %s339 = scalar_lea.vmem %s1, %s338
        %p340 = scmp.eq.s32.totalorder %s28, 0
        // Predicated region
        $region49: #{tpu_custom_call.1} parent=47 // pred_check
          %p341 = pneg %p340
        $region50: #{tpu_custom_call.1} parent=47 // pred_check_branch
          %343 = sbr.rel (%p341) target = $region52
        $region51: #{tpu_custom_call.1} parent=47 // pred_region
          %v344 = vld [vmem:[%s331] sm:$0xff]
          %v345 = vld [vmem:[%s2] sm:$0xff]
          %v346 = vld [vmem:[%s2 + $0x8] sm:$0xff]
          %v347 = vld [vmem:[%s2 + $0x10] sm:$0xff]
          %v348 = vld [vmem:[%s2 + $0x18] sm:$0xff]
          %vm349 = vcmask 261120
          %v351 = vsel %vm349, %v344, 0
          %353 = vmatprep.subr.mxu0 0.0
          %354 = vmatpush1.msra.mxu0 %v345
          %355 = vmatprep.subr.mxu0 0.0
          %356 = vmatpush1.msra.mxu0 %v346
          %357 = vmatprep.subr.mxu0 0.0
          %358 = vmatpush1.msra.mxu0 %v347
          %359 = vmatprep.subr.mxu0 0.0
          %360 = vmatpush1.msra.mxu0 %v348
          %361 = vmatprep.subr.mxu0 0.0
          %362 = vmatpush1.msra.mxu0 0.0
          %363 = vmatprep.subr.mxu0 0.0
          %364 = vmatpush1.msra.mxu0 0.0
          %365 = vmatprep.subr.mxu0 0.0
          %366 = vmatpush1.msra.mxu0 0.0
          %367 = vmatprep.subr.mxu0 0.0
          %368 = vmatpush1.msra.mxu0 0.0
          %369 = vmatprep.subr.mxu0 0.0
          %370 = vmatpush1.msra.mxu0 0.0
          %371 = vmatprep.subr.mxu0 0.0
          %372 = vmatpush1.msra.mxu0 0.0
          %373 = vmatprep.subr.mxu0 0.0
          %374 = vmatpush1.msra.mxu0 0.0
          %375 = vmatprep.subr.mxu0 0.0
          %376 = vmatpush1.msra.mxu0 0.0
          %377 = vmatprep.subr.mxu0 0.0
          %378 = vmatpush1.msra.mxu0 0.0
          %379 = vmatprep.subr.mxu0 0.0
          %380 = vmatpush1.msra.mxu0 0.0
          %381 = vmatprep.subr.mxu0 0.0
          %382 = vmatpush1.msra.mxu0 0.0
          %383 = vmatprep.subr.mxu0 0.0
          %384 = vmatpush1.msra.mxu0 0.0
          %385 = vmatprep.subr.mxu0 0.0
          %386 = vmatpush1.msra.mxu0 0.0
          %387 = vmatprep.subr.mxu0 0.0
          %388 = vmatpush1.msra.mxu0 0.0
          %389 = vmatprep.subr.mxu0 0.0
          %390 = vmatpush1.msra.mxu0 0.0
          %391 = vmatprep.subr.mxu0 0.0
          %392 = vmatpush1.msra.mxu0 0.0
          %393 = vmatprep.subr.mxu0 0.0
          %394 = vmatpush1.msra.mxu0 0.0
          %395 = vmatprep.subr.mxu0 0.0
          %396 = vmatpush1.msra.mxu0 0.0
          %397 = vmatprep.subr.mxu0 0.0
          %398 = vmatpush1.msra.mxu0 0.0
          %399 = vmatprep.subr.mxu0 0.0
          %400 = vmatpush1.msra.mxu0 0.0
          %401 = vmatprep.subr.mxu0 0.0
          %402 = vmatpush1.msra.mxu0 0.0
          %403 = vmatprep.subr.mxu0 0.0
          %404 = vmatpush1.msra.mxu0 0.0
          %405 = vmatprep.subr.mxu0 0.0
          %406 = vmatpush1.msra.mxu0 0.0
          %407 = vmatprep.subr.mxu0 0.0
          %408 = vmatpush1.msra.mxu0 0.0
          %409 = vmatprep.subr.mxu0 0.0
          %410 = vmatpush1.msra.mxu0 0.0
          %411 = vmatprep.subr.mxu0 0.0
          %412 = vmatpush1.msra.mxu0 0.0
          %413 = vmatprep.subr.mxu0 0.0
          %414 = vmatpush1.msra.mxu0 0.0
          %415 = vmatprep.subr.mxu0 0.0
          %416 = vmatpush1.msra.mxu0 0.0
          %417 = vmatprep.mubr.f32.mxu0 0.0
          %418 = vmatmul.mubr.f32.gmra.mrb[0].mxu0 %v351
          %v419 = vpop.f32.mrb[0].mxu0
          %v420 = vadd.f32 0.0, %v419
          %v421 = vpop.f32.mrb[0].mxu0
          %422 = vdwg.mxu0
          %v423 = vmul.f32 %v420, 0.25
          %vm424 = vcmask 130048
          %425 = vst.msk [vmem:[#allocation2] sm:$0xff] %vm424, %v423
          %s426 = scalar_lea.vmem %s2, 32
          %v427 = vld [vmem:[%s426] sm:$0xff]
          %v428 = vld [vmem:[%s426 + $0x8] sm:$0xff]
          %v429 = vld [vmem:[%s426 + $0x10] sm:$0xff]
          %v430 = vld [vmem:[%s426 + $0x18] sm:$0xff]
          %431 = vmatprep.subr.mxu0 0.0
          %432 = vmatpush1.msra.mxu0 %v427
          %433 = vmatprep.subr.mxu0 0.0
          %434 = vmatpush1.msra.mxu0 %v428
          %435 = vmatprep.subr.mxu0 0.0
          %436 = vmatpush1.msra.mxu0 %v429
          %437 = vmatprep.subr.mxu0 0.0
          %438 = vmatpush1.msra.mxu0 %v430
          %439 = vmatprep.subr.mxu0 0.0
          %440 = vmatpush1.msra.mxu0 0.0
          %441 = vmatprep.subr.mxu0 0.0
          %442 = vmatpush1.msra.mxu0 0.0
          %443 = vmatprep.subr.mxu0 0.0
          %444 = vmatpush1.msra.mxu0 0.0
          %445 = vmatprep.subr.mxu0 0.0
          %446 = vmatpush1.msra.mxu0 0.0
          %447 = vmatprep.subr.mxu0 0.0
          %448 = vmatpush1.msra.mxu0 0.0
          %449 = vmatprep.subr.mxu0 0.0
          %450 = vmatpush1.msra.mxu0 0.0
          %451 = vmatprep.subr.mxu0 0.0
          %452 = vmatpush1.msra.mxu0 0.0
          %453 = vmatprep.subr.mxu0 0.0
          %454 = vmatpush1.msra.mxu0 0.0
          %455 = vmatprep.subr.mxu0 0.0
          %456 = vmatpush1.msra.mxu0 0.0
          %457 = vmatprep.subr.mxu0 0.0
          %458 = vmatpush1.msra.mxu0 0.0
          %459 = vmatprep.subr.mxu0 0.0
          %460 = vmatpush1.msra.mxu0 0.0
          %461 = vmatprep.subr.mxu0 0.0
          %462 = vmatpush1.msra.mxu0 0.0
          %463 = vmatprep.subr.mxu0 0.0
          %464 = vmatpush1.msra.mxu0 0.0
          %465 = vmatprep.subr.mxu0 0.0
          %466 = vmatpush1.msra.mxu0 0.0
          %467 = vmatprep.subr.mxu0 0.0
          %468 = vmatpush1.msra.mxu0 0.0
          %469 = vmatprep.subr.mxu0 0.0
          %470 = vmatpush1.msra.mxu0 0.0
          %471 = vmatprep.subr.mxu0 0.0
          %472 = vmatpush1.msra.mxu0 0.0
          %473 = vmatprep.subr.mxu0 0.0
          %474 = vmatpush1.msra.mxu0 0.0
          %475 = vmatprep.subr.mxu0 0.0
          %476 = vmatpush1.msra.mxu0 0.0
          %477 = vmatprep.subr.mxu0 0.0
          %478 = vmatpush1.msra.mxu0 0.0
          %479 = vmatprep.subr.mxu0 0.0
          %480 = vmatpush1.msra.mxu0 0.0
          %481 = vmatprep.subr.mxu0 0.0
          %482 = vmatpush1.msra.mxu0 0.0
          %483 = vmatprep.subr.mxu0 0.0
          %484 = vmatpush1.msra.mxu0 0.0
          %485 = vmatprep.subr.mxu0 0.0
          %486 = vmatpush1.msra.mxu0 0.0
          %487 = vmatprep.subr.mxu0 0.0
          %488 = vmatpush1.msra.mxu0 0.0
          %489 = vmatprep.subr.mxu0 0.0
          %490 = vmatpush1.msra.mxu0 0.0
          %491 = vmatprep.subr.mxu0 0.0
          %492 = vmatpush1.msra.mxu0 0.0
          %493 = vmatprep.subr.mxu0 0.0
          %494 = vmatpush1.msra.mxu0 0.0
          %495 = vmatprep.mubr.f32.mxu0 0.0
          %496 = vmatmul.mubr.f32.gmra.mrb[0].mxu0 %v351
          %v497 = vpop.f32.mrb[0].mxu0
          %v498 = vadd.f32 0.0, %v497
          %v499 = vpop.f32.mrb[0].mxu0
          %500 = vdwg.mxu0
          %v501 = vmul.f32 %v498, 0.25
          %s502 = scalar_lea.vmem [#allocation2], 8
          %503 = vst.msk [vmem:[%s502] sm:$0xff] %vm424, %v501
          %vm504 = vcmask 7168
          %505 = vst.msk [vmem:[#allocation3] sm:$0xff] %vm504, -inf
          %506 = vst.msk [vmem:[#allocation3 + $0x8] sm:$0xff] %vm504, -inf
          %507 = vst.msk [vmem:[#allocation4] sm:$0xff] %vm504, 0.0
          %508 = vst.msk [vmem:[#allocation4 + $0x8] sm:$0xff] %vm504, 0.0
          %509 = vst.msk [vmem:[#allocation5] sm:$0xff] %vm424, 0.0
          %510 = vst.msk [vmem:[#allocation5 + $0x8] sm:$0xff] %vm424, 0.0
        $region52: #{tpu_custom_call.1} parent=47 // pred_fallthru
          _
        %v511 = vld [vmem:[%s339] sm:$0xff]
        %v512 = vld [vmem:[%s3] sm:$0xff]
        %v513 = vld [vmem:[%s3 + $0x8] sm:$0xff]
        %v514 = vld [vmem:[%s3 + $0x10] sm:$0xff]
        %v515 = vld [vmem:[%s3 + $0x18] sm:$0xff]
        %vm516 = vcmask 261120
        %v518 = vsel %vm516, %v511, 0
        %520 = vmatprep.subr.mxu0 0.0
        %521 = vmatpush1.msra.mxu0 %v512
        %522 = vmatprep.subr.mxu0 0.0
        %523 = vmatpush1.msra.mxu0 %v513
        %524 = vmatprep.subr.mxu0 0.0
        %525 = vmatpush1.msra.mxu0 %v514
        %526 = vmatprep.subr.mxu0 0.0
        %527 = vmatpush1.msra.mxu0 %v515
        %528 = vmatprep.subr.mxu0 0.0
        %529 = vmatpush1.msra.mxu0 0.0
        %530 = vmatprep.subr.mxu0 0.0
        %531 = vmatpush1.msra.mxu0 0.0
        %532 = vmatprep.subr.mxu0 0.0
        %533 = vmatpush1.msra.mxu0 0.0
        %534 = vmatprep.subr.mxu0 0.0
        %535 = vmatpush1.msra.mxu0 0.0
        %536 = vmatprep.subr.mxu0 0.0
        %537 = vmatpush1.msra.mxu0 0.0
        %538 = vmatprep.subr.mxu0 0.0
        %539 = vmatpush1.msra.mxu0 0.0
        %540 = vmatprep.subr.mxu0 0.0
        %541 = vmatpush1.msra.mxu0 0.0
        %542 = vmatprep.subr.mxu0 0.0
        %543 = vmatpush1.msra.mxu0 0.0
        %544 = vmatprep.subr.mxu0 0.0
        %545 = vmatpush1.msra.mxu0 0.0
        %546 = vmatprep.subr.mxu0 0.0
        %547 = vmatpush1.msra.mxu0 0.0
        %548 = vmatprep.subr.mxu0 0.0
        %549 = vmatpush1.msra.mxu0 0.0
        %550 = vmatprep.subr.mxu0 0.0
        %551 = vmatpush1.msra.mxu0 0.0
        %552 = vmatprep.subr.mxu0 0.0
        %553 = vmatpush1.msra.mxu0 0.0
        %554 = vmatprep.subr.mxu0 0.0
        %555 = vmatpush1.msra.mxu0 0.0
        %556 = vmatprep.subr.mxu0 0.0
        %557 = vmatpush1.msra.mxu0 0.0
        %558 = vmatprep.subr.mxu0 0.0
        %559 = vmatpush1.msra.mxu0 0.0
        %560 = vmatprep.subr.mxu0 0.0
        %561 = vmatpush1.msra.mxu0 0.0
        %562 = vmatprep.subr.mxu0 0.0
        %563 = vmatpush1.msra.mxu0 0.0
        %564 = vmatprep.subr.mxu0 0.0
        %565 = vmatpush1.msra.mxu0 0.0
        %566 = vmatprep.subr.mxu0 0.0
        %567 = vmatpush1.msra.mxu0 0.0
        %568 = vmatprep.subr.mxu0 0.0
        %569 = vmatpush1.msra.mxu0 0.0
        %570 = vmatprep.subr.mxu0 0.0
        %571 = vmatpush1.msra.mxu0 0.0
        %572 = vmatprep.subr.mxu0 0.0
        %573 = vmatpush1.msra.mxu0 0.0
        %574 = vmatprep.subr.mxu0 0.0
        %575 = vmatpush1.msra.mxu0 0.0
        %576 = vmatprep.subr.mxu0 0.0
        %577 = vmatpush1.msra.mxu0 0.0
        %578 = vmatprep.subr.mxu0 0.0
        %579 = vmatpush1.msra.mxu0 0.0
        %580 = vmatprep.subr.mxu0 0.0
        %581 = vmatpush1.msra.mxu0 0.0
        %582 = vmatprep.subr.mxu0 0.0
        %583 = vmatpush1.msra.mxu0 0.0
        %584 = vmatprep.mubr.f32.mxu0 0.0
        %585 = vmatmul.mubr.f32.gmra.mrb[0].mxu0 %v518
        %v586 = vpop.f32.mrb[0].mxu0
        %v587 = vadd.f32 0.0, %v586
        %v588 = vpop.f32.mrb[0].mxu0
        %589 = vdwg.mxu0
        %v590 = vld [vmem:[%s4] sm:$0xff]
        %v591 = vld [vmem:[%s4 + $0x8] sm:$0xff]
        %v592 = vld [vmem:[%s4 + $0x10] sm:$0xff]
        %v593 = vld [vmem:[%s4 + $0x18] sm:$0xff]
        %594 = vmatprep.subr.mxu0 0.0
        %595 = vmatpush1.msra.mxu0 %v590
        %596 = vmatprep.subr.mxu0 0.0
        %597 = vmatpush1.msra.mxu0 %v591
        %598 = vmatprep.subr.mxu0 0.0
        %599 = vmatpush1.msra.mxu0 %v592
        %600 = vmatprep.subr.mxu0 0.0
        %601 = vmatpush1.msra.mxu0 %v593
        %602 = vmatprep.subr.mxu0 0.0
        %603 = vmatpush1.msra.mxu0 0.0
        %604 = vmatprep.subr.mxu0 0.0
        %605 = vmatpush1.msra.mxu0 0.0
        %606 = vmatprep.subr.mxu0 0.0
        %607 = vmatpush1.msra.mxu0 0.0
        %608 = vmatprep.subr.mxu0 0.0
        %609 = vmatpush1.msra.mxu0 0.0
        %610 = vmatprep.subr.mxu0 0.0
        %611 = vmatpush1.msra.mxu0 0.0
        %612 = vmatprep.subr.mxu0 0.0
        %613 = vmatpush1.msra.mxu0 0.0
        %614 = vmatprep.subr.mxu0 0.0
        %615 = vmatpush1.msra.mxu0 0.0
        %616 = vmatprep.subr.mxu0 0.0
        %617 = vmatpush1.msra.mxu0 0.0
        %618 = vmatprep.subr.mxu0 0.0
        %619 = vmatpush1.msra.mxu0 0.0
        %620 = vmatprep.subr.mxu0 0.0
        %621 = vmatpush1.msra.mxu0 0.0
        %622 = vmatprep.subr.mxu0 0.0
        %623 = vmatpush1.msra.mxu0 0.0
        %624 = vmatprep.subr.mxu0 0.0
        %625 = vmatpush1.msra.mxu0 0.0
        %626 = vmatprep.subr.mxu0 0.0
        %627 = vmatpush1.msra.mxu0 0.0
        %628 = vmatprep.subr.mxu0 0.0
        %629 = vmatpush1.msra.mxu0 0.0
        %630 = vmatprep.subr.mxu0 0.0
        %631 = vmatpush1.msra.mxu0 0.0
        %632 = vmatprep.subr.mxu0 0.0
        %633 = vmatpush1.msra.mxu0 0.0
        %634 = vmatprep.subr.mxu0 0.0
        %635 = vmatpush1.msra.mxu0 0.0
        %636 = vmatprep.subr.mxu0 0.0
        %637 = vmatpush1.msra.mxu0 0.0
        %638 = vmatprep.subr.mxu0 0.0
        %639 = vmatpush1.msra.mxu0 0.0
        %640 = vmatprep.subr.mxu0 0.0
        %641 = vmatpush1.msra.mxu0 0.0
        %642 = vmatprep.subr.mxu0 0.0
        %643 = vmatpush1.msra.mxu0 0.0
        %644 = vmatprep.subr.mxu0 0.0
        %645 = vmatpush1.msra.mxu0 0.0
        %646 = vmatprep.subr.mxu0 0.0
        %647 = vmatpush1.msra.mxu0 0.0
        %648 = vmatprep.subr.mxu0 0.0
        %649 = vmatpush1.msra.mxu0 0.0
        %650 = vmatprep.subr.mxu0 0.0
        %651 = vmatpush1.msra.mxu0 0.0
        %652 = vmatprep.subr.mxu0 0.0
        %653 = vmatpush1.msra.mxu0 0.0
        %654 = vmatprep.subr.mxu0 0.0
        %655 = vmatpush1.msra.mxu0 0.0
        %656 = vmatprep.subr.mxu0 0.0
        %657 = vmatpush1.msra.mxu0 0.0
        %658 = vmatprep.mubr.f32.mxu0 0.0
        %659 = vmatmul.mubr.f32.gmra.mrb[0].mxu0 %v518
        %v660 = vpop.f32.mrb[0].mxu0
        %v661 = vadd.f32 0.0, %v660
        %v662 = vpop.f32.mrb[0].mxu0
        %663 = vdwg.mxu0
        %v664 = vld [vmem:[#allocation2] sm:$0xff]
        %vm665 = vcmask 130048
        %v667 = vsel %vm665, %v664, 0
        %v670 = vsel %vm665, %v587, 0
        %672 = vmatprep.subr.mxu0 0.0
        %673 = vmatpush1.xpose.msra.mxu0 %v670
        %674 = vmatprep.subr.mxu0 0.0
        %675 = vmatpush1.xpose.msra.mxu0 0.0
        %676 = vmatprep.subr.mxu0 0.0
        %677 = vmatpush1.xpose.msra.mxu0 0.0
        %678 = vmatprep.subr.mxu0 0.0
        %679 = vmatpush1.xpose.msra.mxu0 0.0
        %680 = vmatprep.subr.mxu0 0.0
        %681 = vmatpush1.xpose.msra.mxu0 0.0
        %682 = vmatprep.subr.mxu0 0.0
        %683 = vmatpush1.xpose.msra.mxu0 0.0
        %684 = vmatprep.subr.mxu0 0.0
        %685 = vmatpush1.xpose.msra.mxu0 0.0
        %686 = vmatprep.subr.mxu0 0.0
        %687 = vmatpush1.xpose.msra.mxu0 0.0
        %688 = vmatprep.subr.mxu0 0.0
        %689 = vmatpush1.xpose.msra.mxu0 0.0
        %690 = vmatprep.subr.mxu0 0.0
        %691 = vmatpush1.xpose.msra.mxu0 0.0
        %692 = vmatprep.subr.mxu0 0.0
        %693 = vmatpush1.xpose.msra.mxu0 0.0
        %694 = vmatprep.subr.mxu0 0.0
        %695 = vmatpush1.xpose.msra.mxu0 0.0
        %696 = vmatprep.subr.mxu0 0.0
        %697 = vmatpush1.xpose.msra.mxu0 0.0
        %698 = vmatprep.subr.mxu0 0.0
        %699 = vmatpush1.xpose.msra.mxu0 0.0
        %700 = vmatprep.subr.mxu0 0.0
        %701 = vmatpush1.xpose.msra.mxu0 0.0
        %702 = vmatprep.subr.mxu0 0.0
        %703 = vmatpush1.xpose.msra.mxu0 0.0
        %704 = vmatprep.subr.mxu0 0.0
        %705 = vmatpush1.xpose.msra.mxu0 0.0
        %706 = vmatprep.subr.mxu0 0.0
        %707 = vmatpush1.xpose.msra.mxu0 0.0
        %708 = vmatprep.subr.mxu0 0.0
        %709 = vmatpush1.xpose.msra.mxu0 0.0
        %710 = vmatprep.subr.mxu0 0.0
        %711 = vmatpush1.xpose.msra.mxu0 0.0
        %712 = vmatprep.subr.mxu0 0.0
        %713 = vmatpush1.xpose.msra.mxu0 0.0
        %714 = vmatprep.subr.mxu0 0.0
        %715 = vmatpush1.xpose.msra.mxu0 0.0
        %716 = vmatprep.subr.mxu0 0.0
        %717 = vmatpush1.xpose.msra.mxu0 0.0
        %718 = vmatprep.subr.mxu0 0.0
        %719 = vmatpush1.xpose.msra.mxu0 0.0
        %720 = vmatprep.subr.mxu0 0.0
        %721 = vmatpush1.xpose.msra.mxu0 0.0
        %722 = vmatprep.subr.mxu0 0.0
        %723 = vmatpush1.xpose.msra.mxu0 0.0
        %724 = vmatprep.subr.mxu0 0.0
        %725 = vmatpush1.xpose.msra.mxu0 0.0
        %726 = vmatprep.subr.mxu0 0.0
        %727 = vmatpush1.xpose.msra.mxu0 0.0
        %728 = vmatprep.subr.mxu0 0.0
        %729 = vmatpush1.xpose.msra.mxu0 0.0
        %730 = vmatprep.subr.mxu0 0.0
        %731 = vmatpush1.xpose.msra.mxu0 0.0
        %732 = vmatprep.subr.mxu0 0.0
        %733 = vmatpush1.xpose.msra.mxu0 0.0
        %734 = vmatprep.subr.mxu0 0.0
        %735 = vmatpush1.xpose.msra.mxu0 0.0
        %736 = vmatprep.mubr.f32.mxu0 0.0
        %737 = vmatmul.mubr.f32.gmra.mrb[0].mxu0 %v667
        %v738 = vpop.f32.mrb[0].mxu0
        %v739 = vadd.f32 0.0, %v738
        %v740 = vpop.f32.mrb[0].mxu0
        %741 = vdwg.mxu0
        %v742 = vld [vmem:[#allocation3] sm:$0xff]
        %vm743 = vcmask 64512
        %v744 = vsel %vm743, %v739, -inf
        %745 = vmax.xlane.f32.xlu0 %v744
        %v746 = vpop.xlane.xlu0 %745
        %v747 = vmax.f32 %v742, %v746
        %v748 = vsub.f32 %v742, %v747
        %v749 = vmul.f32 %v748, 1.442695
        %v750 = vpow.pop %v749
        %752 = vset.pattern.permute.xlu0 0
        %753 = vperm.xlu0 %752, %v747
        %v754 = vpop.permute.xlu0 %753
        %v756 = vsub.f32 %v739, %v754
        %v757 = vmul.f32 %v756, 1.442695
        %v758 = vpow.pop %v757
        %v759 = vld [vmem:[#allocation4] sm:$0xff]
        %v760 = vmul.f32 %v750, %v759
        %v761 = vsel %vm743, %v758, 0.0
        %762 = vadd.xlane.f32.xlu0 %v761
        %v763 = vpop.xlane.xlu0 %762
        %v764 = vadd.f32 %v760, %v763
        %vm765 = vcmask 7168
        %766 = vst.msk [vmem:[#allocation4] sm:$0xff] %vm765, %v764
        %v767 = vld [vmem:[#allocation5] sm:$0xff]
        %769 = vset.pattern.permute.xlu0 0
        %770 = vperm.xlu0 %769, %v750
        %v771 = vpop.permute.xlu0 %770
        %v773 = vmul.f32 %v771, %v767
        %v775 = vsel %vm743, %v758, 0
        %777 = vmatprep.subr.mxu0 0.0
        %778 = vmatpush1.msra.mxu0 %v661
        %779 = vmatprep.subr.mxu0 0.0
        %780 = vmatpush1.msra.mxu0 0.0
        %781 = vmatprep.subr.mxu0 0.0
        %782 = vmatpush1.msra.mxu0 0.0
        %783 = vmatprep.subr.mxu0 0.0
        %784 = vmatpush1.msra.mxu0 0.0
        %785 = vmatprep.subr.mxu0 0.0
        %786 = vmatpush1.msra.mxu0 0.0
        %787 = vmatprep.subr.mxu0 0.0
        %788 = vmatpush1.msra.mxu0 0.0
        %789 = vmatprep.subr.mxu0 0.0
        %790 = vmatpush1.msra.mxu0 0.0
        %791 = vmatprep.subr.mxu0 0.0
        %792 = vmatpush1.msra.mxu0 0.0
        %793 = vmatprep.subr.mxu0 0.0
        %794 = vmatpush1.msra.mxu0 0.0
        %795 = vmatprep.subr.mxu0 0.0
        %796 = vmatpush1.msra.mxu0 0.0
        %797 = vmatprep.subr.mxu0 0.0
        %798 = vmatpush1.msra.mxu0 0.0
        %799 = vmatprep.subr.mxu0 0.0
        %800 = vmatpush1.msra.mxu0 0.0
        %801 = vmatprep.subr.mxu0 0.0
        %802 = vmatpush1.msra.mxu0 0.0
        %803 = vmatprep.subr.mxu0 0.0
        %804 = vmatpush1.msra.mxu0 0.0
        %805 = vmatprep.subr.mxu0 0.0
        %806 = vmatpush1.msra.mxu0 0.0
        %807 = vmatprep.subr.mxu0 0.0
        %808 = vmatpush1.msra.mxu0 0.0
        %809 = vmatprep.subr.mxu0 0.0
        %810 = vmatpush1.msra.mxu0 0.0
        %811 = vmatprep.subr.mxu0 0.0
        %812 = vmatpush1.msra.mxu0 0.0
        %813 = vmatprep.subr.mxu0 0.0
        %814 = vmatpush1.msra.mxu0 0.0
        %815 = vmatprep.subr.mxu0 0.0
        %816 = vmatpush1.msra.mxu0 0.0
        %817 = vmatprep.subr.mxu0 0.0
        %818 = vmatpush1.msra.mxu0 0.0
        %819 = vmatprep.subr.mxu0 0.0
        %820 = vmatpush1.msra.mxu0 0.0
        %821 = vmatprep.subr.mxu0 0.0
        %822 = vmatpush1.msra.mxu0 0.0
        %823 = vmatprep.subr.mxu0 0.0
        %824 = vmatpush1.msra.mxu0 0.0
        %825 = vmatprep.subr.mxu0 0.0
        %826 = vmatpush1.msra.mxu0 0.0
        %827 = vmatprep.subr.mxu0 0.0
        %828 = vmatpush1.msra.mxu0 0.0
        %829 = vmatprep.subr.mxu0 0.0
        %830 = vmatpush1.msra.mxu0 0.0
        %831 = vmatprep.subr.mxu0 0.0
        %832 = vmatpush1.msra.mxu0 0.0
        %833 = vmatprep.subr.mxu0 0.0
        %834 = vmatpush1.msra.mxu0 0.0
        %835 = vmatprep.subr.mxu0 0.0
        %836 = vmatpush1.msra.mxu0 0.0
        %837 = vmatprep.subr.mxu0 0.0
        %838 = vmatpush1.msra.mxu0 0.0
        %839 = vmatprep.subr.mxu0 0.0
        %840 = vmatpush1.msra.mxu0 0.0
        %841 = vmatprep.mubr.f32.mxu0 0.0
        %842 = vmatmul.mubr.f32.gmra.mrb[0].mxu0 %v775
        %v843 = vpop.f32.mrb[0].mxu0
        %v844 = vadd.f32 0.0, %v843
        %v845 = vpop.f32.mrb[0].mxu0
        %846 = vdwg.mxu0
        %v847 = vadd.f32 %v773, %v844
        %848 = vst.msk [vmem:[#allocation5] sm:$0xff] %vm665, %v847
        %849 = vst.msk [vmem:[#allocation3] sm:$0xff] %vm765, %v747
        %s850 = scalar_lea.vmem %s3, 32
        %v851 = vld [vmem:[%s850] sm:$0xff]
        %v852 = vld [vmem:[%s850 + $0x8] sm:$0xff]
        %v853 = vld [vmem:[%s850 + $0x10] sm:$0xff]
        %v854 = vld [vmem:[%s850 + $0x18] sm:$0xff]
        %855 = vmatprep.subr.mxu0 0.0
        %856 = vmatpush1.msra.mxu0 %v851
        %857 = vmatprep.subr.mxu0 0.0
        %858 = vmatpush1.msra.mxu0 %v852
        %859 = vmatprep.subr.mxu0 0.0
        %860 = vmatpush1.msra.mxu0 %v853
        %861 = vmatprep.subr.mxu0 0.0
        %862 = vmatpush1.msra.mxu0 %v854
        %863 = vmatprep.subr.mxu0 0.0
        %864 = vmatpush1.msra.mxu0 0.0
        %865 = vmatprep.subr.mxu0 0.0
        %866 = vmatpush1.msra.mxu0 0.0
        %867 = vmatprep.subr.mxu0 0.0
        %868 = vmatpush1.msra.mxu0 0.0
        %869 = vmatprep.subr.mxu0 0.0
        %870 = vmatpush1.msra.mxu0 0.0
        %871 = vmatprep.subr.mxu0 0.0
        %872 = vmatpush1.msra.mxu0 0.0
        %873 = vmatprep.subr.mxu0 0.0
        %874 = vmatpush1.msra.mxu0 0.0
        %875 = vmatprep.subr.mxu0 0.0
        %876 = vmatpush1.msra.mxu0 0.0
        %877 = vmatprep.subr.mxu0 0.0
        %878 = vmatpush1.msra.mxu0 0.0
        %879 = vmatprep.subr.mxu0 0.0
        %880 = vmatpush1.msra.mxu0 0.0
        %881 = vmatprep.subr.mxu0 0.0
        %882 = vmatpush1.msra.mxu0 0.0
        %883 = vmatprep.subr.mxu0 0.0
        %884 = vmatpush1.msra.mxu0 0.0
        %885 = vmatprep.subr.mxu0 0.0
        %886 = vmatpush1.msra.mxu0 0.0
        %887 = vmatprep.subr.mxu0 0.0
        %888 = vmatpush1.msra.mxu0 0.0
        %889 = vmatprep.subr.mxu0 0.0
        %890 = vmatpush1.msra.mxu0 0.0
        %891 = vmatprep.subr.mxu0 0.0
        %892 = vmatpush1.msra.mxu0 0.0
        %893 = vmatprep.subr.mxu0 0.0
        %894 = vmatpush1.msra.mxu0 0.0
        %895 = vmatprep.subr.mxu0 0.0
        %896 = vmatpush1.msra.mxu0 0.0
        %897 = vmatprep.subr.mxu0 0.0
        %898 = vmatpush1.msra.mxu0 0.0
        %899 = vmatprep.subr.mxu0 0.0
        %900 = vmatpush1.msra.mxu0 0.0
        %901 = vmatprep.subr.mxu0 0.0
        %902 = vmatpush1.msra.mxu0 0.0
        %903 = vmatprep.subr.mxu0 0.0
        %904 = vmatpush1.msra.mxu0 0.0
        %905 = vmatprep.subr.mxu0 0.0
        %906 = vmatpush1.msra.mxu0 0.0
        %907 = vmatprep.subr.mxu0 0.0
        %908 = vmatpush1.msra.mxu0 0.0
        %909 = vmatprep.subr.mxu0 0.0
        %910 = vmatpush1.msra.mxu0 0.0
        %911 = vmatprep.subr.mxu0 0.0
        %912 = vmatpush1.msra.mxu0 0.0
        %913 = vmatprep.subr.mxu0 0.0
        %914 = vmatpush1.msra.mxu0 0.0
        %915 = vmatprep.subr.mxu0 0.0
        %916 = vmatpush1.msra.mxu0 0.0
        %917 = vmatprep.subr.mxu0 0.0
        %918 = vmatpush1.msra.mxu0 0.0
        %919 = vmatprep.mubr.f32.mxu0 0.0
        %920 = vmatmul.mubr.f32.gmra.mrb[0].mxu0 %v518
        %v921 = vpop.f32.mrb[0].mxu0
        %v922 = vadd.f32 0.0, %v921
        %v923 = vpop.f32.mrb[0].mxu0
        %924 = vdwg.mxu0
        %s925 = scalar_lea.vmem %s4, 32
        %v926 = vld [vmem:[%s925] sm:$0xff]
        %v927 = vld [vmem:[%s925 + $0x8] sm:$0xff]
        %v928 = vld [vmem:[%s925 + $0x10] sm:$0xff]
        %v929 = vld [vmem:[%s925 + $0x18] sm:$0xff]
        %930 = vmatprep.subr.mxu0 0.0
        %931 = vmatpush1.msra.mxu0 %v926
        %932 = vmatprep.subr.mxu0 0.0
        %933 = vmatpush1.msra.mxu0 %v927
        %934 = vmatprep.subr.mxu0 0.0
        %935 = vmatpush1.msra.mxu0 %v928
        %936 = vmatprep.subr.mxu0 0.0
        %937 = vmatpush1.msra.mxu0 %v929
        %938 = vmatprep.subr.mxu0 0.0
        %939 = vmatpush1.msra.mxu0 0.0
        %940 = vmatprep.subr.mxu0 0.0
        %941 = vmatpush1.msra.mxu0 0.0
        %942 = vmatprep.subr.mxu0 0.0
        %943 = vmatpush1.msra.mxu0 0.0
        %944 = vmatprep.subr.mxu0 0.0
        %945 = vmatpush1.msra.mxu0 0.0
        %946 = vmatprep.subr.mxu0 0.0
        %947 = vmatpush1.msra.mxu0 0.0
        %948 = vmatprep.subr.mxu0 0.0
        %949 = vmatpush1.msra.mxu0 0.0
        %950 = vmatprep.subr.mxu0 0.0
        %951 = vmatpush1.msra.mxu0 0.0
        %952 = vmatprep.subr.mxu0 0.0
        %953 = vmatpush1.msra.mxu0 0.0
        %954 = vmatprep.subr.mxu0 0.0
        %955 = vmatpush1.msra.mxu0 0.0
        %956 = vmatprep.subr.mxu0 0.0
        %957 = vmatpush1.msra.mxu0 0.0
        %958 = vmatprep.subr.mxu0 0.0
        %959 = vmatpush1.msra.mxu0 0.0
        %960 = vmatprep.subr.mxu0 0.0
        %961 = vmatpush1.msra.mxu0 0.0
        %962 = vmatprep.subr.mxu0 0.0
        %963 = vmatpush1.msra.mxu0 0.0
        %964 = vmatprep.subr.mxu0 0.0
        %965 = vmatpush1.msra.mxu0 0.0
        %966 = vmatprep.subr.mxu0 0.0
        %967 = vmatpush1.msra.mxu0 0.0
        %968 = vmatprep.subr.mxu0 0.0
        %969 = vmatpush1.msra.mxu0 0.0
        %970 = vmatprep.subr.mxu0 0.0
        %971 = vmatpush1.msra.mxu0 0.0
        %972 = vmatprep.subr.mxu0 0.0
        %973 = vmatpush1.msra.mxu0 0.0
        %974 = vmatprep.subr.mxu0 0.0
        %975 = vmatpush1.msra.mxu0 0.0
        %976 = vmatprep.subr.mxu0 0.0
        %977 = vmatpush1.msra.mxu0 0.0
        %978 = vmatprep.subr.mxu0 0.0
        %979 = vmatpush1.msra.mxu0 0.0
        %980 = vmatprep.subr.mxu0 0.0
        %981 = vmatpush1.msra.mxu0 0.0
        %982 = vmatprep.subr.mxu0 0.0
        %983 = vmatpush1.msra.mxu0 0.0
        %984 = vmatprep.subr.mxu0 0.0
        %985 = vmatpush1.msra.mxu0 0.0
        %986 = vmatprep.subr.mxu0 0.0
        %987 = vmatpush1.msra.mxu0 0.0
        %988 = vmatprep.subr.mxu0 0.0
        %989 = vmatpush1.msra.mxu0 0.0
        %990 = vmatprep.subr.mxu0 0.0
        %991 = vmatpush1.msra.mxu0 0.0
        %992 = vmatprep.subr.mxu0 0.0
        %993 = vmatpush1.msra.mxu0 0.0
        %994 = vmatprep.mubr.f32.mxu0 0.0
        %995 = vmatmul.mubr.f32.gmra.mrb[0].mxu0 %v518
        %v996 = vpop.f32.mrb[0].mxu0
        %v997 = vadd.f32 0.0, %v996
        %v998 = vpop.f32.mrb[0].mxu0
        %999 = vdwg.mxu0
        %s1000 = scalar_lea.vmem [#allocation2], 8
        %v1001 = vld [vmem:[%s1000] sm:$0xff]
        %v1003 = vsel %vm665, %v1001, 0
        %v1006 = vsel %vm665, %v922, 0
        %1008 = vmatprep.subr.mxu0 0.0
        %1009 = vmatpush1.xpose.msra.mxu0 %v1006
        %1010 = vmatprep.subr.mxu0 0.0
        %1011 = vmatpush1.xpose.msra.mxu0 0.0
        %1012 = vmatprep.subr.mxu0 0.0
        %1013 = vmatpush1.xpose.msra.mxu0 0.0
        %1014 = vmatprep.subr.mxu0 0.0
        %1015 = vmatpush1.xpose.msra.mxu0 0.0
        %1016 = vmatprep.subr.mxu0 0.0
        %1017 = vmatpush1.xpose.msra.mxu0 0.0
        %1018 = vmatprep.subr.mxu0 0.0
        %1019 = vmatpush1.xpose.msra.mxu0 0.0
        %1020 = vmatprep.subr.mxu0 0.0
        %1021 = vmatpush1.xpose.msra.mxu0 0.0
        %1022 = vmatprep.subr.mxu0 0.0
        %1023 = vmatpush1.xpose.msra.mxu0 0.0
        %1024 = vmatprep.subr.mxu0 0.0
        %1025 = vmatpush1.xpose.msra.mxu0 0.0
        %1026 = vmatprep.subr.mxu0 0.0
        %1027 = vmatpush1.xpose.msra.mxu0 0.0
        %1028 = vmatprep.subr.mxu0 0.0
        %1029 = vmatpush1.xpose.msra.mxu0 0.0
        %1030 = vmatprep.subr.mxu0 0.0
        %1031 = vmatpush1.xpose.msra.mxu0 0.0
        %1032 = vmatprep.subr.mxu0 0.0
        %1033 = vmatpush1.xpose.msra.mxu0 0.0
        %1034 = vmatprep.subr.mxu0 0.0
        %1035 = vmatpush1.xpose.msra.mxu0 0.0
        %1036 = vmatprep.subr.mxu0 0.0
        %1037 = vmatpush1.xpose.msra.mxu0 0.0
        %1038 = vmatprep.subr.mxu0 0.0
        %1039 = vmatpush1.xpose.msra.mxu0 0.0
        %1040 = vmatprep.subr.mxu0 0.0
        %1041 = vmatpush1.xpose.msra.mxu0 0.0
        %1042 = vmatprep.subr.mxu0 0.0
        %1043 = vmatpush1.xpose.msra.mxu0 0.0
        %1044 = vmatprep.subr.mxu0 0.0
        %1045 = vmatpush1.xpose.msra.mxu0 0.0
        %1046 = vmatprep.subr.mxu0 0.0
        %1047 = vmatpush1.xpose.msra.mxu0 0.0
        %1048 = vmatprep.subr.mxu0 0.0
        %1049 = vmatpush1.xpose.msra.mxu0 0.0
        %1050 = vmatprep.subr.mxu0 0.0
        %1051 = vmatpush1.xpose.msra.mxu0 0.0
        %1052 = vmatprep.subr.mxu0 0.0
        %1053 = vmatpush1.xpose.msra.mxu0 0.0
        %1054 = vmatprep.subr.mxu0 0.0
        %1055 = vmatpush1.xpose.msra.mxu0 0.0
        %1056 = vmatprep.subr.mxu0 0.0
        %1057 = vmatpush1.xpose.msra.mxu0 0.0
        %1058 = vmatprep.subr.mxu0 0.0
        %1059 = vmatpush1.xpose.msra.mxu0 0.0
        %1060 = vmatprep.subr.mxu0 0.0
        %1061 = vmatpush1.xpose.msra.mxu0 0.0
        %1062 = vmatprep.subr.mxu0 0.0
        %1063 = vmatpush1.xpose.msra.mxu0 0.0
        %1064 = vmatprep.subr.mxu0 0.0
        %1065 = vmatpush1.xpose.msra.mxu0 0.0
        %1066 = vmatprep.subr.mxu0 0.0
        %1067 = vmatpush1.xpose.msra.mxu0 0.0
        %1068 = vmatprep.subr.mxu0 0.0
        %1069 = vmatpush1.xpose.msra.mxu0 0.0
        %1070 = vmatprep.subr.mxu0 0.0
        %1071 = vmatpush1.xpose.msra.mxu0 0.0
        %1072 = vmatprep.mubr.f32.mxu0 0.0
        %1073 = vmatmul.mubr.f32.gmra.mrb[0].mxu0 %v1003
        %v1074 = vpop.f32.mrb[0].mxu0
        %v1075 = vadd.f32 0.0, %v1074
        %v1076 = vpop.f32.mrb[0].mxu0
        %1077 = vdwg.mxu0
        %s1078 = scalar_lea.vmem [#allocation3], 8
        %v1079 = vld [vmem:[%s1078] sm:$0xff]
        %v1080 = vsel %vm743, %v1075, -inf
        %1081 = vmax.xlane.f32.xlu0 %v1080
        %v1082 = vpop.xlane.xlu0 %1081
        %v1083 = vmax.f32 %v1079, %v1082
        %v1084 = vsub.f32 %v1079, %v1083
        %v1085 = vmul.f32 %v1084, 1.442695
        %v1086 = vpow.pop %v1085
        %1088 = vset.pattern.permute.xlu0 0
        %1089 = vperm.xlu0 %1088, %v1083
        %v1090 = vpop.permute.xlu0 %1089
        %v1092 = vsub.f32 %v1075, %v1090
        %v1093 = vmul.f32 %v1092, 1.442695
        %v1094 = vpow.pop %v1093
        %s1095 = scalar_lea.vmem [#allocation4], 8
        %v1096 = vld [vmem:[%s1095] sm:$0xff]
        %v1097 = vmul.f32 %v1086, %v1096
        %v1098 = vsel %vm743, %v1094, 0.0
        %1099 = vadd.xlane.f32.xlu0 %v1098
        %v1100 = vpop.xlane.xlu0 %1099
        %v1101 = vadd.f32 %v1097, %v1100
        %1102 = vst.msk [vmem:[%s1095] sm:$0xff] %vm765, %v1101
        %s1103 = scalar_lea.vmem [#allocation5], 8
        %v1104 = vld [vmem:[%s1103] sm:$0xff]
        %1106 = vset.pattern.permute.xlu0 0
        %1107 = vperm.xlu0 %1106, %v1086
        %v1108 = vpop.permute.xlu0 %1107
        %v1110 = vmul.f32 %v1108, %v1104
        %v1112 = vsel %vm743, %v1094, 0
        %1114 = vmatprep.subr.mxu0 0.0
        %1115 = vmatpush1.msra.mxu0 %v997
        %1116 = vmatprep.subr.mxu0 0.0
        %1117 = vmatpush1.msra.mxu0 0.0
        %1118 = vmatprep.subr.mxu0 0.0
        %1119 = vmatpush1.msra.mxu0 0.0
        %1120 = vmatprep.subr.mxu0 0.0
        %1121 = vmatpush1.msra.mxu0 0.0
        %1122 = vmatprep.subr.mxu0 0.0
        %1123 = vmatpush1.msra.mxu0 0.0
        %1124 = vmatprep.subr.mxu0 0.0
        %1125 = vmatpush1.msra.mxu0 0.0
        %1126 = vmatprep.subr.mxu0 0.0
        %1127 = vmatpush1.msra.mxu0 0.0
        %1128 = vmatprep.subr.mxu0 0.0
        %1129 = vmatpush1.msra.mxu0 0.0
        %1130 = vmatprep.subr.mxu0 0.0
        %1131 = vmatpush1.msra.mxu0 0.0
        %1132 = vmatprep.subr.mxu0 0.0
        %1133 = vmatpush1.msra.mxu0 0.0
        %1134 = vmatprep.subr.mxu0 0.0
        %1135 = vmatpush1.msra.mxu0 0.0
        %1136 = vmatprep.subr.mxu0 0.0
        %1137 = vmatpush1.msra.mxu0 0.0
        %1138 = vmatprep.subr.mxu0 0.0
        %1139 = vmatpush1.msra.mxu0 0.0
        %1140 = vmatprep.subr.mxu0 0.0
        %1141 = vmatpush1.msra.mxu0 0.0
        %1142 = vmatprep.subr.mxu0 0.0
        %1143 = vmatpush1.msra.mxu0 0.0
        %1144 = vmatprep.subr.mxu0 0.0
        %1145 = vmatpush1.msra.mxu0 0.0
        %1146 = vmatprep.subr.mxu0 0.0
        %1147 = vmatpush1.msra.mxu0 0.0
        %1148 = vmatprep.subr.mxu0 0.0
        %1149 = vmatpush1.msra.mxu0 0.0
        %1150 = vmatprep.subr.mxu0 0.0
        %1151 = vmatpush1.msra.mxu0 0.0
        %1152 = vmatprep.subr.mxu0 0.0
        %1153 = vmatpush1.msra.mxu0 0.0
        %1154 = vmatprep.subr.mxu0 0.0
        %1155 = vmatpush1.msra.mxu0 0.0
        %1156 = vmatprep.subr.mxu0 0.0
        %1157 = vmatpush1.msra.mxu0 0.0
        %1158 = vmatprep.subr.mxu0 0.0
        %1159 = vmatpush1.msra.mxu0 0.0
        %1160 = vmatprep.subr.mxu0 0.0
        %1161 = vmatpush1.msra.mxu0 0.0
        %1162 = vmatprep.subr.mxu0 0.0
        %1163 = vmatpush1.msra.mxu0 0.0
        %1164 = vmatprep.subr.mxu0 0.0
        %1165 = vmatpush1.msra.mxu0 0.0
        %1166 = vmatprep.subr.mxu0 0.0
        %1167 = vmatpush1.msra.mxu0 0.0
        %1168 = vmatprep.subr.mxu0 0.0
        %1169 = vmatpush1.msra.mxu0 0.0
        %1170 = vmatprep.subr.mxu0 0.0
        %1171 = vmatpush1.msra.mxu0 0.0
        %1172 = vmatprep.subr.mxu0 0.0
        %1173 = vmatpush1.msra.mxu0 0.0
        %1174 = vmatprep.subr.mxu0 0.0
        %1175 = vmatpush1.msra.mxu0 0.0
        %1176 = vmatprep.subr.mxu0 0.0
        %1177 = vmatpush1.msra.mxu0 0.0
        %1178 = vmatprep.mubr.f32.mxu0 0.0
        %1179 = vmatmul.mubr.f32.gmra.mrb[0].mxu0 %v1112
        %v1180 = vpop.f32.mrb[0].mxu0
        %v1181 = vadd.f32 0.0, %v1180
        %v1182 = vpop.f32.mrb[0].mxu0
        %1183 = vdwg.mxu0
        %v1184 = vadd.f32 %v1110, %v1181
        %1185 = vst.msk [vmem:[%s1103] sm:$0xff] %vm665, %v1184
        %1186 = vst.msk [vmem:[%s1078] sm:$0xff] %vm765, %v1083
        %p1187 = scmp.eq.s32.totalorder %s28, 1
        // Predicated region
        $region53: #{tpu_custom_call.1} parent=47 // pred_check
          %p1188 = pneg %p1187
        $region54: #{tpu_custom_call.1} parent=47 // pred_check_branch
          %1190 = sbr.rel (%p1188) target = $region56
        $region55: #{tpu_custom_call.1} parent=47 // pred_region
          %v1191 = vld [vmem:[#allocation5] sm:$0xff]
          %v1192 = vld [vmem:[#allocation4] sm:$0xff]
          %v1193 = vrcp.pop %v1192
          %1195 = vset.pattern.permute.xlu0 0
          %1196 = vperm.xlu0 %1195, %v1193
          %v1197 = vpop.permute.xlu0 %1196
          %v1199 = vmul.f32 %v1191, %v1197
          %v1200 = vld [vmem:[%s5] sm:$0xff]
          %v1201 = vld [vmem:[%s5 + $0x8] sm:$0xff]
          %v1202 = vld [vmem:[%s1103] sm:$0xff]
          %v1203 = vld [vmem:[%s1095] sm:$0xff]
          %v1204 = vrcp.pop %v1203
          %1206 = vset.pattern.permute.xlu0 0
          %1207 = vperm.xlu0 %1206, %v1204
          %v1208 = vpop.permute.xlu0 %1207
          %v1210 = vmul.f32 %v1202, %v1208
          %s1211 = scalar_lea.vmem %s5, 16
          %v1212 = vld [vmem:[%s1211] sm:$0xff]
          %v1213 = vld [vmem:[%s1211 + $0x8] sm:$0xff]
          %v1215 = vsel %vm665, %v1210, 0
          %1217 = vmatprep.subr.mxu0 0.0
          %1218 = vmatpush1.msra.mxu0 %v1212
          %1219 = vmatprep.subr.mxu0 0.0
          %1220 = vmatpush1.msra.mxu0 %v1213
          %1221 = vmatprep.subr.mxu0 0.0
          %1222 = vmatpush1.msra.mxu0 0.0
          %1223 = vmatprep.subr.mxu0 0.0
          %1224 = vmatpush1.msra.mxu0 0.0
          %1225 = vmatprep.subr.mxu0 0.0
          %1226 = vmatpush1.msra.mxu0 0.0
          %1227 = vmatprep.subr.mxu0 0.0
          %1228 = vmatpush1.msra.mxu0 0.0
          %1229 = vmatprep.subr.mxu0 0.0
          %1230 = vmatpush1.msra.mxu0 0.0
          %1231 = vmatprep.subr.mxu0 0.0
          %1232 = vmatpush1.msra.mxu0 0.0
          %1233 = vmatprep.subr.mxu0 0.0
          %1234 = vmatpush1.msra.mxu0 0.0
          %1235 = vmatprep.subr.mxu0 0.0
          %1236 = vmatpush1.msra.mxu0 0.0
          %1237 = vmatprep.subr.mxu0 0.0
          %1238 = vmatpush1.msra.mxu0 0.0
          %1239 = vmatprep.subr.mxu0 0.0
          %1240 = vmatpush1.msra.mxu0 0.0
          %1241 = vmatprep.subr.mxu0 0.0
          %1242 = vmatpush1.msra.mxu0 0.0
          %1243 = vmatprep.subr.mxu0 0.0
          %1244 = vmatpush1.msra.mxu0 0.0
          %1245 = vmatprep.subr.mxu0 0.0
          %1246 = vmatpush1.msra.mxu0 0.0
          %1247 = vmatprep.subr.mxu0 0.0
          %1248 = vmatpush1.msra.mxu0 0.0
          %1249 = vmatprep.subr.mxu0 0.0
          %1250 = vmatpush1.msra.mxu0 0.0
          %1251 = vmatprep.subr.mxu0 0.0
          %1252 = vmatpush1.msra.mxu0 0.0
          %1253 = vmatprep.subr.mxu0 0.0
          %1254 = vmatpush1.msra.mxu0 0.0
          %1255 = vmatprep.subr.mxu0 0.0
          %1256 = vmatpush1.msra.mxu0 0.0
          %1257 = vmatprep.subr.mxu0 0.0
          %1258 = vmatpush1.msra.mxu0 0.0
          %1259 = vmatprep.subr.mxu0 0.0
          %1260 = vmatpush1.msra.mxu0 0.0
          %1261 = vmatprep.subr.mxu0 0.0
          %1262 = vmatpush1.msra.mxu0 0.0
          %1263 = vmatprep.subr.mxu0 0.0
          %1264 = vmatpush1.msra.mxu0 0.0
          %1265 = vmatprep.subr.mxu0 0.0
          %1266 = vmatpush1.msra.mxu0 0.0
          %1267 = vmatprep.subr.mxu0 0.0
          %1268 = vmatpush1.msra.mxu0 0.0
          %1269 = vmatprep.subr.mxu0 0.0
          %1270 = vmatpush1.msra.mxu0 0.0
          %1271 = vmatprep.subr.mxu0 0.0
          %1272 = vmatpush1.msra.mxu0 0.0
          %1273 = vmatprep.subr.mxu0 0.0
          %1274 = vmatpush1.msra.mxu0 0.0
          %1275 = vmatprep.subr.mxu0 0.0
          %1276 = vmatpush1.msra.mxu0 0.0
          %1277 = vmatprep.subr.mxu0 0.0
          %1278 = vmatpush1.msra.mxu0 0.0
          %1279 = vmatprep.subr.mxu0 0.0
          %1280 = vmatpush1.msra.mxu0 0.0
          %1281 = vmatprep.mubr.f32.mxu0 0.0
          %1282 = vmatmul.mubr.f32.gmra.mrb[0].mxu0 %v1215
          %v1283 = vpop.f32.mrb[0].mxu0
          %v1284 = vadd.f32 0.0, %v1283
          %v1285 = vpop.f32.mrb[0].mxu0
          %1286 = vdwg.mxu0
          %v1288 = vsel %vm665, %v1199, 0
          %1290 = vmatprep.subr.mxu0 0.0
          %1291 = vmatpush1.msra.mxu0 %v1200
          %1292 = vmatprep.subr.mxu0 0.0
          %1293 = vmatpush1.msra.mxu0 %v1201
          %1294 = vmatprep.subr.mxu0 0.0
          %1295 = vmatpush1.msra.mxu0 0.0
          %1296 = vmatprep.subr.mxu0 0.0
          %1297 = vmatpush1.msra.mxu0 0.0
          %1298 = vmatprep.subr.mxu0 0.0
          %1299 = vmatpush1.msra.mxu0 0.0
          %1300 = vmatprep.subr.mxu0 0.0
          %1301 = vmatpush1.msra.mxu0 0.0
          %1302 = vmatprep.subr.mxu0 0.0
          %1303 = vmatpush1.msra.mxu0 0.0
          %1304 = vmatprep.subr.mxu0 0.0
          %1305 = vmatpush1.msra.mxu0 0.0
          %1306 = vmatprep.subr.mxu0 0.0
          %1307 = vmatpush1.msra.mxu0 0.0
          %1308 = vmatprep.subr.mxu0 0.0
          %1309 = vmatpush1.msra.mxu0 0.0
          %1310 = vmatprep.subr.mxu0 0.0
          %1311 = vmatpush1.msra.mxu0 0.0
          %1312 = vmatprep.subr.mxu0 0.0
          %1313 = vmatpush1.msra.mxu0 0.0
          %1314 = vmatprep.subr.mxu0 0.0
          %1315 = vmatpush1.msra.mxu0 0.0
          %1316 = vmatprep.subr.mxu0 0.0
          %1317 = vmatpush1.msra.mxu0 0.0
          %1318 = vmatprep.subr.mxu0 0.0
          %1319 = vmatpush1.msra.mxu0 0.0
          %1320 = vmatprep.subr.mxu0 0.0
          %1321 = vmatpush1.msra.mxu0 0.0
          %1322 = vmatprep.subr.mxu0 0.0
          %1323 = vmatpush1.msra.mxu0 0.0
          %1324 = vmatprep.subr.mxu0 0.0
          %1325 = vmatpush1.msra.mxu0 0.0
          %1326 = vmatprep.subr.mxu0 0.0
          %1327 = vmatpush1.msra.mxu0 0.0
          %1328 = vmatprep.subr.mxu0 0.0
          %1329 = vmatpush1.msra.mxu0 0.0
          %1330 = vmatprep.subr.mxu0 0.0
          %1331 = vmatpush1.msra.mxu0 0.0
          %1332 = vmatprep.subr.mxu0 0.0
          %1333 = vmatpush1.msra.mxu0 0.0
          %1334 = vmatprep.subr.mxu0 0.0
          %1335 = vmatpush1.msra.mxu0 0.0
          %1336 = vmatprep.subr.mxu0 0.0
          %1337 = vmatpush1.msra.mxu0 0.0
          %1338 = vmatprep.subr.mxu0 0.0
          %1339 = vmatpush1.msra.mxu0 0.0
          %1340 = vmatprep.subr.mxu0 0.0
          %1341 = vmatpush1.msra.mxu0 0.0
          %1342 = vmatprep.subr.mxu0 0.0
          %1343 = vmatpush1.msra.mxu0 0.0
          %1344 = vmatprep.subr.mxu0 0.0
          %1345 = vmatpush1.msra.mxu0 0.0
          %1346 = vmatprep.subr.mxu0 0.0
          %1347 = vmatpush1.msra.mxu0 0.0
          %1348 = vmatprep.subr.mxu0 0.0
          %1349 = vmatpush1.msra.mxu0 0.0
          %1350 = vmatprep.subr.mxu0 0.0
          %1351 = vmatpush1.msra.mxu0 0.0
          %1352 = vmatprep.subr.mxu0 0.0
          %1353 = vmatpush1.msra.mxu0 0.0
          %1354 = vmatprep.mubr.f32.mxu0 0.0
          %1355 = vmatmul.mubr.f32.gmra.mrb[0].mxu0 %v1288
          %v1356 = vpop.f32.mrb[0].mxu0
          %v1357 = vadd.f32 %v1284, %v1356
          %v1358 = vpop.f32.mrb[0].mxu0
          %1359 = vdwg.mxu0
          %v1360 = vld [vmem:[%s6] sm:$0x1]
          %v1362 = vlaneseq
          %v1363 = vshrl.u32 %v1362, 7
          %v1364 = vsub.s32 0, %v1363
          %v1365 = vrot.slane %v1360, %v1364
          %v1367 = vadd.f32 %v1357, %v1365
          %1368 = vst.msk [vmem:[%s323] sm:$0xff] %vm516, %v1367
        $region56: #{tpu_custom_call.1} parent=47 // pred_fallthru
          _
        %s1369 = sand.u32 %s211, 1
        %s1370 = scalar_lea.sflag [#allocation7], %s1369
        %s1371 = sand.u32 %s211, 1
        %s1372 = smul.addr %s1371, 8
        %s1373 = scalar_lea.vmem [#allocation6], %s1372
        // Predicated region
        $region57: #{tpu_custom_call.1} parent=47 // pred_check
          %p1374 = pneg %p221
        $region58: #{tpu_custom_call.1} parent=47 // pred_check_branch
          %1376 = sbr.rel (%p1374) target = $region60
        $region59: #{tpu_custom_call.1} parent=47 // pred_region
          %s1378 = ssub.s32 128, 128
          %1379 = vsyncadd %s1370, %s1378
          %s1380 = smul.addr %s26, 2
          %s1381 = sadd.s32 %s27, %s1380
          %s1382 = smul.addr %s1381, 128
          %s1383 = scalar_lea.hbm %s7, %s1382
          %s1385 = sshll.u32 %s1373, 4
          %s1386 = int_to_ptr.vmem [resolvable:$true] %s1385
          %1388 = dma.vmem_to_hbm [thread:$0]  %s1386, 128, %s1383, %s1370
        $region60: #{tpu_custom_call.1} parent=47 // pred_fallthru
          _
      $region48: #{tpu_custom_call.1} parent=5 // pred_fallthru
        _
      %p1389 = scmp.le.s32.totalorder 2, %s16
      // Predicated region
      $region61: #{tpu_custom_call.1} parent=5 // pred_check
        %p1390 = pneg %p1389
      $region62: #{tpu_custom_call.1} parent=5 // pred_check_branch
        %1392 = sbr.rel (%p1390) target = $region64
      $region63: #{tpu_custom_call.1} parent=5 // pred_region
        %s1393 = ssub.s32 %s16, 2
        // Predicated region
        $region65: #{tpu_custom_call.1} parent=63 // pred_check
          %p1394 = pneg %p227
        $region66: #{tpu_custom_call.1} parent=63 // pred_check_branch
          %1396 = sbr.rel (%p1394) target = $region68
        $region67: #{tpu_custom_call.1} parent=63 // pred_region
          %s1397 = sand.u32 %s212, 1
          %s1398 = scalar_lea.sflag [#allocation7], %s1397
          %s1399 = sand.u32 %s212, 1
          %s1400 = smul.addr %s1399, 8
          %s1401 = scalar_lea.vmem [#allocation6], %s1400
          %1402 = dma.done %s1398, 128
        $region68: #{tpu_custom_call.1} parent=63 // pred_fallthru
          _
      $region64: #{tpu_custom_call.1} parent=5 // pred_fallthru
        _
    $region6: #{tpu_custom_call.1} parent=1 // loop_footer
      %s20 = sadd.s32 1, %s16
    $region7: #{tpu_custom_call.1} parent=1 // loop_footer_branch
      %15 = sbr.rel target = $region3
    $region8: #{tpu_custom_call.1} parent=1 // loop_exit
      _
    %1403 = vsyncpa [#allocation7], 1
    %s1404 = scalar_lea.sflag [#allocation7], 1
    %1405 = vsyncpa %s1404, 1

</llo_original>
